<compile_context>
chip_gen: v5e
topology: v5e:2x2
jax: 0.10.0
libtpu: 0.0.40
codegen_flags: <defaults>
</compile_context>

<pallas_src>
import jax
import jax.numpy as jnp
from jax.experimental import pallas as pl
from jax.experimental.pallas import tpu as pltpu


# --------------------------------------------------------------------------
# helpers
# --------------------------------------------------------------------------
def _round_up(n, m):
    return ((n + m - 1) // m) * m


def _vmem_limit_bytes():
    """Per-generation scoped-VMEM limit (v5e/v6e: 128 MiB phys, v7x: 64 MiB)."""
    phys = 64 * 1024 * 1024  # conservative (v7x-sized) fallback
    try:
        phys = int(pltpu.get_tpu_info().vmem_capacity_bytes)
    except Exception:
        pass
    # ~16 MiB headroom for compiler-internal scratch; cap at 100 MiB.
    return max(32 << 20, min(phys - (16 << 20), 100 << 20))


def make_plan(B, V, K, H, E, *, block_v=None, block_b=None):
    """Derive tile sizes from a VMEM budget instead of a fixed ladder."""
    vmem_limit = _vmem_limit_bytes()

    if block_b is None:
        block_b = next((t for t in (512, 256, 128, 64, 32, 16, 8) if B % t == 0), B)

    if block_v is None:
        # Resident across the whole Call-1 vocab reduction (x2 for buffering of
        # the constant-index BlockSpecs): bf16 w2/wt/topic_emb, bias/BN vectors,
        # f32 acc scratch, dtd/lse outputs.
        resident = (
            2 * (H * H * 2 + H * K * 2 + K * E * 2 + 12 * H * 4 + 2 * K * 4)
            + B * H * 4 + B * K * 4 + K * 8
        )
        budget = vmem_limit - resident - (4 << 20)
        # Double-buffered streaming bytes per vocab column:
        #   bf16 x (B) + bf16 w1 (H) + bf16 weT (E) in, f32 sim (K) out.
        per_col = 2 * (2 * (B + H + E) + 4 * K)
        bv = (budget // max(per_col, 1)) // 128 * 128
        block_v = int(max(128, min(2048, bv)))

    block_v = int(min(block_v, _round_up(V, 128)))
    v_pad = _round_up(V, block_v)

    return {
        "B": int(B), "V": int(V), "K": int(K), "H": int(H), "E": int(E),
        "block_v": int(block_v), "block_b": int(block_b),
        "v_pad": int(v_pad), "vmem_limit": int(vmem_limit),
    }


def prepare_params(params, plan):
    """One-time cache of bf16 / transposed / padded operands (removes per-call
    HBM transpose+cast traffic of word_emb and w1)."""
    V, H = params["w1"].shape
    v_pad = plan["v_pad"]
    pad = v_pad - V

    w1 = params["w1"]
    we = params["word_emb"]
    if pad:
        w1 = jnp.pad(w1, ((0, pad), (0, 0)))  # zero rows -> no contribution
        we = jnp.pad(we, ((0, pad), (0, 0)))  # zero rows; masked in-kernel

    prepared = dict(params)
    prepared["w1_bf"] = w1.astype(jnp.bfloat16)            # [v_pad, H]
    prepared["weT_bf"] = we.T.astype(jnp.bfloat16)          # [E, v_pad]
    prepared["te_bf"] = params["topic_emb"].astype(jnp.bfloat16)   # [K, E]
    prepared["w2_bf"] = params["w2"].astype(jnp.bfloat16)   # [H, H]
    prepared["wt_bf"] = params["wt"].astype(jnp.bfloat16)   # [H, K]
    return prepared


# --------------------------------------------------------------------------
# Kernel 1: encoder (reduction over V) + online softmax stats + sim cache
# --------------------------------------------------------------------------
def _make_encoder_stats_kernel(v_true, block_v, need_mask):
    def encoder_stats_kernel(
        x_ref,                              # [B, tV]   bf16 (vocab tile)
        w1_ref,                             # [tV, H]   bf16 (vocab tile)
        weT_ref,                            # [E, tV]   bf16 (vocab tile)
        b1_ref, g1_ref, be1_ref,            # [1, H]    f32
        w2_ref,                             # [H, H]    bf16
        b2_ref, g2_ref, be2_ref,            # [1, H]    f32
        wt_ref,                             # [H, K]    bf16
        bt_ref,                             # [1, K]    f32
        te_ref,                             # [K, E]    bf16
        dtd_ref,                            # out [B, K]   f32
        lse_ref,                            # out [K, 1]   f32
        sim_ref,                            # out [K, tV]  f32 (cached for Call 2)
        acc_ref,                            # scratch [B, H] f32
        m_ref,                              # scratch [K, 1] f32
        l_ref,                              # scratch [K, 1] f32
    ):
        v = pl.program_id(0)

        @pl.when(v == 0)
        def _init():
            acc_ref[...] = jnp.zeros_like(acc_ref)
            m_ref[...] = jnp.full_like(m_ref, -jnp.inf)
            l_ref[...] = jnp.zeros_like(l_ref)

        # ---- stream x @ W1 over vocab tiles (bf16 MXU, f32 accumulation) ----
        acc_ref[...] += jnp.dot(
            x_ref[...], w1_ref[...], preferred_element_type=jnp.float32
        )

        # ---- sim tile + online softmax statistics ----
        sim = jnp.dot(te_ref[...], weT_ref[...],
                      preferred_element_type=jnp.float32)          # [K, tV]
        if need_mask:
            col = v * block_v + jax.lax.broadcasted_iota(jnp.int32, sim.shape, 1)
            sim = jnp.where(col < v_true, sim, -1e30)               # kill pad cols
        sim_ref[...] = sim

        m_prev = m_ref[...]
        m_new = jnp.maximum(m_prev, jnp.max(sim, axis=1, keepdims=True))
        l_ref[...] = l_ref[...] * jnp.exp(m_prev - m_new) + jnp.sum(
            jnp.exp(sim - m_new), axis=1, keepdims=True
        )
        m_ref[...] = m_new

        # ---- finalize on the last vocab tile ----
        @pl.when(v == pl.num_programs(0) - 1)
        def _finalize():
            eps = 1e-5

            # layer 1: Linear -> BatchNorm1d (batch stats) -> ReLU
            h = acc_ref[...] + b1_ref[...]
            mean1 = jnp.mean(h, axis=0, keepdims=True)
            var1 = jnp.mean((h - mean1) * (h - mean1), axis=0, keepdims=True)
            h = (h - mean1) * jax.lax.rsqrt(var1 + eps) * g1_ref[...] + be1_ref[...]
            h = jnp.maximum(h, 0.0)
            # TODO(synk): Dropout -> identity (eval semantics).

            # layer 2: Linear (bf16 MXU, f32 acc) -> BatchNorm1d -> ReLU
            h = jnp.dot(h.astype(jnp.bfloat16), w2_ref[...],
                        preferred_element_type=jnp.float32) + b2_ref[...]
            mean2 = jnp.mean(h, axis=0, keepdims=True)
            var2 = jnp.mean((h - mean2) * (h - mean2), axis=0, keepdims=True)
            h = (h - mean2) * jax.lax.rsqrt(var2 + eps) * g2_ref[...] + be2_ref[...]
            h = jnp.maximum(h, 0.0)

            # topic layer + EXACT softmax over topics (rows sum to 1 in f32)
            logits = jnp.dot(h.astype(jnp.bfloat16), wt_ref[...],
                             preferred_element_type=jnp.float32) + bt_ref[...]
            logits = logits - jnp.max(logits, axis=1, keepdims=True)
            e = jnp.exp(logits)
            dtd = e / jnp.sum(e, axis=1, keepdims=True)

            dtd_ref[...] = dtd.astype(dtd_ref.dtype)
            lse_ref[...] = m_ref[...] + jnp.log(l_ref[...])

    return encoder_stats_kernel


# --------------------------------------------------------------------------
# Kernel 2: topic-word softmax tile + document-word reconstruction
# --------------------------------------------------------------------------
def topic_word_recon_kernel(
    sim_ref,   # [K, tV] f32 (cached similarity tile from Call 1)
    dtd_ref,   # [tb, K] f32
    lse_ref,   # [K, 1]  f32 (logsumexp over the FULL vocab, per topic)
    dwd_ref,   # out [tb, tV] bf16
):
    twd = jnp.exp(sim_ref[...] - lse_ref[...])                 # softmax tile [K, tV]
    dwd = jnp.dot(dtd_ref[...].astype(jnp.bfloat16),
                  twd.astype(jnp.bfloat16),
                  preferred_element_type=jnp.float32)          # [tb, tV]
    dwd_ref[...] = dwd.astype(dwd_ref.dtype)


# --------------------------------------------------------------------------
# Wrapper
# --------------------------------------------------------------------------
def graph_ntm_forward(x, prepared, plan):
    """GraphNTM forward. Returns (doc_word_dist [B,V] bf16, doc_topic_dist [B,K] f32)."""
    B, V = x.shape
    K, H, E = plan["K"], plan["H"], plan["E"]
    block_v, block_b, v_pad = plan["block_v"], plan["block_b"], plan["v_pad"]
    n_v = v_pad // block_v
    n_b = B // block_b

    x_bf = x.astype(jnp.bfloat16)
    if v_pad != V:
        x_bf = jnp.pad(x_bf, ((0, 0), (0, v_pad - V)))

    def whole(shape):
        return pl.BlockSpec(shape, lambda v: tuple(0 for _ in shape))

    enc_kernel = _make_encoder_stats_kernel(V, block_v, v_pad != V)

    # ---- Call 1: encoder + topic-word stats + sim cache (reduction over V) ----
    dtd, lse, sim = pl.pallas_call(
        enc_kernel,
        out_shape=(
            jax.ShapeDtypeStruct((B, K), jnp.float32),       # doc_topic_dist
            jax.ShapeDtypeStruct((K, 1), jnp.float32),       # per-topic logsumexp
            jax.ShapeDtypeStruct((K, v_pad), jnp.float32),   # cached sim (K << E)
        ),
        grid_spec=pltpu.PrefetchScalarGridSpec(
            num_scalar_prefetch=0,
            grid=(n_v,),
            in_specs=[
                pl.BlockSpec((B, block_v), lambda v: (0, v)),   # x
                pl.BlockSpec((block_v, H), lambda v: (v, 0)),   # w1 (bf16)
                pl.BlockSpec((E, block_v), lambda v: (0, v)),   # word_emb^T (bf16)
                whole((1, H)), whole((1, H)), whole((1, H)),    # b1, gamma1, beta1
                whole((H, H)),                                  # w2 (bf16)
                whole((1, H)), whole((1, H)), whole((1, H)),    # b2, gamma2, beta2
                whole((H, K)), whole((1, K)),                   # wt (bf16), bt
                whole((K, E)),                                  # topic_emb (bf16)
            ],
            out_specs=[
                pl.BlockSpec((B, K), lambda v: (0, 0)),
                pl.BlockSpec((K, 1), lambda v: (0, 0)),
                pl.BlockSpec((K, block_v), lambda v: (0, v)),
            ],
            scratch_shapes=[
                pltpu.VMEM((B, H), jnp.float32),   # x @ W1 accumulator
                pltpu.VMEM((K, 1), jnp.float32),   # running max
                pltpu.VMEM((K, 1), jnp.float32),   # running sum-exp
            ],
        ),
        compiler_params=pltpu.CompilerParams(
            dimension_semantics=("arbitrary",),
            vmem_limit_bytes=plan["vmem_limit"],
        ),
    )(
        x_bf, prepared["w1_bf"], prepared["weT_bf"],
        prepared["b1"], prepared["bn1_gamma"], prepared["bn1_beta"],
        prepared["w2_bf"], prepared["b2"], prepared["bn2_gamma"], prepared["bn2_beta"],
        prepared["wt_bf"], prepared["bt"], prepared["te_bf"],
    )

    # ---- Call 2: reconstruction, tiled over (batch, vocab), both parallel ----
    dwd = pl.pallas_call(
        topic_word_recon_kernel,
        out_shape=jax.ShapeDtypeStruct((B, v_pad), jnp.bfloat16),
        grid_spec=pltpu.PrefetchScalarGridSpec(
            num_scalar_prefetch=0,
            grid=(n_b, n_v),
            in_specs=[
                pl.BlockSpec((K, block_v), lambda b, v: (0, v)),     # sim tile
                pl.BlockSpec((block_b, K), lambda b, v: (b, 0)),     # dtd tile
                pl.BlockSpec((K, 1), lambda b, v: (0, 0)),           # lse
            ],
            out_specs=pl.BlockSpec((block_b, block_v), lambda b, v: (b, v)),
        ),
        compiler_params=pltpu.CompilerParams(
            dimension_semantics=("parallel", "parallel"),   # megacore-shardable
            vmem_limit_bytes=plan["vmem_limit"],
        ),
    )(sim, dtd, lse)

    if v_pad != V:
        dwd = dwd[:, :V]   # drop padded vocab columns (they carry zero mass)
    return dwd, dtd


# --------------------------------------------------------------------------
# Params
# --------------------------------------------------------------------------
def make_params(key, vocab_size, num_topics, hidden_size, embedding_dim):
    """Deterministic parameter init (xavier-uniform-style bounds)."""
    ks = jax.random.split(key, 8)

    def xavier(k, shape):
        fan_in, fan_out = shape[0], shape[1]
        bound = jnp.sqrt(6.0 / (fan_in + fan_out))
        return jax.random.uniform(k, shape, jnp.float32, -bound, bound)

    return {
        "word_emb": xavier(ks[0], (vocab_size, embedding_dim)),
        "topic_emb": xavier(ks[1], (num_topics, embedding_dim)),
        "w1": xavier(ks[2], (vocab_size, hidden_size)),
        "b1": jnp.zeros((1, hidden_size), jnp.float32),
        "bn1_gamma": jnp.ones((1, hidden_size), jnp.float32),
        "bn1_beta": jnp.zeros((1, hidden_size), jnp.float32),
        "w2": xavier(ks[3], (hidden_size, hidden_size)),
        "b2": jnp.full((1, hidden_size), 0.01, jnp.float32),
        "bn2_gamma": jnp.ones((1, hidden_size), jnp.float32),
        "bn2_beta": jnp.zeros((1, hidden_size), jnp.float32),
        "wt": xavier(ks[4], (hidden_size, num_topics)),
        "bt": jnp.zeros((1, num_topics), jnp.float32),
    }


if __name__ == "__main__":
    # Small shapes consistent with the module's forward: x is [batch, vocab].
    # vocab_size deliberately NOT a multiple of 128 to exercise the padding +
    # masking path; block_v=128 forces a 2-tile vocab reduction.
    batch = 8
    vocab_size = 250
    num_topics = 16
    hidden_size = 32
    embedding_dim = 128

    key = jax.random.PRNGKey(0)
    k_params, k_x = jax.random.split(key)
    params = make_params(k_params, vocab_size, num_topics, hidden_size, embedding_dim)

    # Synthetic bag-of-words counts (non-negative floats).
    x = jax.random.poisson(k_x, 0.5, (batch, vocab_size)).astype(jnp.float32)

    plan = make_plan(batch, vocab_size, num_topics, hidden_size, embedding_dim,
                     block_v=128)
    prepared = prepare_params(params, plan)   # one-time bf16/transpose/pad cache

    doc_word_dist, doc_topic_dist = graph_ntm_forward(x, prepared, plan)
    jax.block_until_ready((doc_word_dist, doc_topic_dist))

    # Sanity checks: both outputs are (approximately) row-stochastic.
    assert doc_word_dist.shape == (batch, vocab_size)
    assert doc_topic_dist.shape == (batch, num_topics)
    dwd_f32 = doc_word_dist.astype(jnp.float32)
    assert bool(jnp.all(jnp.isfinite(dwd_f32)))
    assert bool(jnp.all(jnp.isfinite(doc_topic_dist)))
    # Exact-division softmax -> tight row sums for doc_topic_dist.
    assert bool(jnp.all(jnp.abs(jnp.sum(doc_topic_dist, axis=1) - 1.0) < 1e-3))
    # doc_word_dist is bf16 with bf16 MXU inputs -> looser tolerance.
    assert bool(jnp.all(jnp.abs(jnp.sum(dwd_f32, axis=1) - 1.0) < 2e-2))

    print("KERNEL_OK")
</pallas_src>

<mosaic_0001>
module attributes {stable_mosaic.version = 11 : i64} {
  func.func @encoder_stats_kernel(%arg0: i32, %arg1: memref<8x128xbf16, #tpu.memory_space<vmem>>, %arg2: memref<128x32xbf16, #tpu.memory_space<vmem>>, %arg3: memref<128x128xbf16, #tpu.memory_space<vmem>>, %arg4: memref<1x32xf32, #tpu.memory_space<vmem>>, %arg5: memref<1x32xf32, #tpu.memory_space<vmem>>, %arg6: memref<1x32xf32, #tpu.memory_space<vmem>>, %arg7: memref<32x32xbf16, #tpu.memory_space<vmem>>, %arg8: memref<1x32xf32, #tpu.memory_space<vmem>>, %arg9: memref<1x32xf32, #tpu.memory_space<vmem>>, %arg10: memref<1x32xf32, #tpu.memory_space<vmem>>, %arg11: memref<32x16xbf16, #tpu.memory_space<vmem>>, %arg12: memref<1x16xf32, #tpu.memory_space<vmem>>, %arg13: memref<16x128xbf16, #tpu.memory_space<vmem>>, %arg14: memref<8x16xf32, #tpu.memory_space<vmem>>, %arg15: memref<16x1xf32, #tpu.memory_space<vmem>>, %arg16: memref<16x128xf32, #tpu.memory_space<vmem>>, %arg17: memref<8x32xf32, #tpu.memory_space<vmem>>, %arg18: memref<16x1xf32, #tpu.memory_space<vmem>>, %arg19: memref<16x1xf32, #tpu.memory_space<vmem>>) attributes {dimension_semantics = [#tpu.dimension_semantics<arbitrary>], iteration_bounds = array<i64: 2>, scalar_prefetch = 0 : i64, scratch_operands = 3 : i64, tpu.core_type = #tpu.core_type<tc>, window_params = [{transform_indices = @transform_0, window_bounds = array<i64: 8, 128>}, {transform_indices = @transform_1, window_bounds = array<i64: 128, 32>}, {transform_indices = @transform_2, window_bounds = array<i64: 128, 128>}, {pipeline_mode = #tpu.pipeline_mode<synchronous>, transform_indices = @transform_3, window_bounds = array<i64: 1, 32>}, {pipeline_mode = #tpu.pipeline_mode<synchronous>, transform_indices = @transform_4, window_bounds = array<i64: 1, 32>}, {pipeline_mode = #tpu.pipeline_mode<synchronous>, transform_indices = @transform_5, window_bounds = array<i64: 1, 32>}, {pipeline_mode = #tpu.pipeline_mode<synchronous>, transform_indices = @transform_6, window_bounds = array<i64: 32, 32>}, {pipeline_mode = #tpu.pipeline_mode<synchronous>, transform_indices = @transform_7, window_bounds = array<i64: 1, 32>}, {pipeline_mode = #tpu.pipeline_mode<synchronous>, transform_indices = @transform_8, window_bounds = array<i64: 1, 32>}, {pipeline_mode = #tpu.pipeline_mode<synchronous>, transform_indices = @transform_9, window_bounds = array<i64: 1, 32>}, {pipeline_mode = #tpu.pipeline_mode<synchronous>, transform_indices = @transform_10, window_bounds = array<i64: 32, 16>}, {pipeline_mode = #tpu.pipeline_mode<synchronous>, transform_indices = @transform_11, window_bounds = array<i64: 1, 16>}, {pipeline_mode = #tpu.pipeline_mode<synchronous>, transform_indices = @transform_12, window_bounds = array<i64: 16, 128>}, {pipeline_mode = #tpu.pipeline_mode<synchronous>, transform_indices = @transform_13, window_bounds = array<i64: 8, 16>}, {pipeline_mode = #tpu.pipeline_mode<synchronous>, transform_indices = @transform_14, window_bounds = array<i64: 16, 1>}, {transform_indices = @transform_15, window_bounds = array<i64: 16, 128>}]} {
    %c0_i32 = arith.constant 0 : i32
    %0 = arith.cmpi eq, %arg0, %c0_i32 : i32
    %1 = arith.extui %0 : i1 to i32
    %c0_i32_0 = arith.constant 0 : i32
    %2 = arith.cmpi ne, %1, %c0_i32_0 : i32
    scf.if %2 {
      %cst_27 = arith.constant 0.000000e+00 : f32
      %40 = vector.broadcast %cst_27 : f32 to vector<8x32xf32>
      %c0_28 = arith.constant 0 : index
      %c0_29 = arith.constant 0 : index
      %41 = vector.load %arg17[%c0_28, %c0_29] : memref<8x32xf32, #tpu.memory_space<vmem>>, vector<8x32xf32>
      tpu.vector_store %arg17[%c0_28, %c0_29], %40 {strides = array<i32>} : memref<8x32xf32, #tpu.memory_space<vmem>>, vector<8x32xf32>,
      %cst_30 = arith.constant 0xFF800000 : f32
      %42 = vector.broadcast %cst_30 : f32 to vector<16x1xf32>
      %c0_31 = arith.constant 0 : index
      %c0_32 = arith.constant 0 : index
      %43 = vector.load %arg18[%c0_31, %c0_32] : memref<16x1xf32, #tpu.memory_space<vmem>>, vector<16x1xf32>
      tpu.vector_store %arg18[%c0_31, %c0_32], %42 {strides = array<i32>} : memref<16x1xf32, #tpu.memory_space<vmem>>, vector<16x1xf32>,
      %cst_33 = arith.constant 0.000000e+00 : f32
      %44 = vector.broadcast %cst_33 : f32 to vector<16x1xf32>
      %c0_34 = arith.constant 0 : index
      %c0_35 = arith.constant 0 : index
      %45 = vector.load %arg19[%c0_34, %c0_35] : memref<16x1xf32, #tpu.memory_space<vmem>>, vector<16x1xf32>
      tpu.vector_store %arg19[%c0_34, %c0_35], %44 {strides = array<i32>} : memref<16x1xf32, #tpu.memory_space<vmem>>, vector<16x1xf32>,
    } else {
    }
    %c0 = arith.constant 0 : index
    %c0_1 = arith.constant 0 : index
    %3 = vector.load %arg17[%c0, %c0_1] : memref<8x32xf32, #tpu.memory_space<vmem>>, vector<8x32xf32>
    %c0_2 = arith.constant 0 : index
    %c0_3 = arith.constant 0 : index
    %4 = vector.load %arg1[%c0_2, %c0_3] : memref<8x128xbf16, #tpu.memory_space<vmem>>, vector<8x128xbf16>
    %c0_4 = arith.constant 0 : index
    %c0_5 = arith.constant 0 : index
    %5 = vector.load %arg2[%c0_4, %c0_5] : memref<128x32xbf16, #tpu.memory_space<vmem>>, vector<128x32xbf16>
    %cst = arith.constant dense<0.000000e+00> : vector<8x32xf32>
    %6 = tpu.matmul %4, %5, %cst {dimension_numbers = #tpu.dot_dimension_numbers<[1], [0], [0], [1], [0, 0, 1, 1], [], []>} : vector<8x128xbf16>, vector<128x32xbf16>, vector<8x32xf32> -> vector<8x32xf32>
    %7 = arith.addf %3, %6 : vector<8x32xf32>
    %c0_6 = arith.constant 0 : index
    %c0_7 = arith.constant 0 : index
    %8 = vector.load %arg17[%c0_6, %c0_7] : memref<8x32xf32, #tpu.memory_space<vmem>>, vector<8x32xf32>
    tpu.vector_store %arg17[%c0_6, %c0_7], %7 {strides = array<i32>} : memref<8x32xf32, #tpu.memory_space<vmem>>, vector<8x32xf32>,
    %c0_8 = arith.constant 0 : index
    %c0_9 = arith.constant 0 : index
    %9 = vector.load %arg13[%c0_8, %c0_9] : memref<16x128xbf16, #tpu.memory_space<vmem>>, vector<16x128xbf16>
    %c0_10 = arith.constant 0 : index
    %c0_11 = arith.constant 0 : index
    %10 = vector.load %arg3[%c0_10, %c0_11] : memref<128x128xbf16, #tpu.memory_space<vmem>>, vector<128x128xbf16>
    %cst_12 = arith.constant dense<0.000000e+00> : vector<16x128xf32>
    %11 = tpu.matmul %9, %10, %cst_12 {dimension_numbers = #tpu.dot_dimension_numbers<[1], [0], [0], [1], [0, 0, 1, 1], [], []>} : vector<16x128xbf16>, vector<128x128xbf16>, vector<16x128xf32> -> vector<16x128xf32>
    %c128_i32 = arith.constant 128 : i32
    %12 = arith.muli %arg0, %c128_i32 : i32
    %13 = tpu.iota {dimensions = array<i32: 1>} : vector<16x128xi32>
    %14 = vector.broadcast %12 : i32 to vector<16x128xi32>
    %15 = arith.addi %14, %13 : vector<16x128xi32>
    %c250_i32 = arith.constant 250 : i32
    %16 = vector.broadcast %c250_i32 : i32 to vector<16x128xi32>
    %17 = arith.cmpi slt, %15, %16 : vector<16x128xi32>
    %cst_13 = arith.constant -1.000000e+30 : f32
    %18 = vector.broadcast %cst_13 : f32 to vector<16x128xf32>
    %19 = arith.select %17, %11, %18 : vector<16x128xi1>, vector<16x128xf32>
    %c0_14 = arith.constant 0 : index
    %c0_15 = arith.constant 0 : index
    %20 = vector.load %arg16[%c0_14, %c0_15] : memref<16x128xf32, #tpu.memory_space<vmem>>, vector<16x128xf32>
    tpu.vector_store %arg16[%c0_14, %c0_15], %19 {strides = array<i32>} : memref<16x128xf32, #tpu.memory_space<vmem>>, vector<16x128xf32>,
    %c0_16 = arith.constant 0 : index
    %c0_17 = arith.constant 0 : index
    %21 = vector.load %arg18[%c0_16, %c0_17] : memref<16x1xf32, #tpu.memory_space<vmem>>, vector<16x1xf32>
    %cst_18 = arith.constant dense<0xFF800000> : vector<16xf32>
    %22 = vector.multi_reduction <maximumf>, %19, %cst_18 [1] : vector<16x128xf32> to vector<16xf32>
    %23 = vector.shape_cast %22 : vector<16xf32> to vector<16x1xf32>
    %24 = arith.maximumf %21, %23 : vector<16x1xf32>
    %c0_19 = arith.constant 0 : index
    %c0_20 = arith.constant 0 : index
    %25 = vector.load %arg19[%c0_19, %c0_20] : memref<16x1xf32, #tpu.memory_space<vmem>>, vector<16x1xf32>
    %26 = arith.subf %21, %24 : vector<16x1xf32>
    %27 = math.exp %26 : vector<16x1xf32>
    %28 = arith.mulf %25, %27 : vector<16x1xf32>
    %29 = vector.broadcast %24 : vector<16x1xf32> to vector<16x128xf32>
    %30 = arith.subf %19, %29 : vector<16x128xf32>
    %31 = math.exp %30 : vector<16x128xf32>
    %cst_21 = arith.constant dense<0.000000e+00> : vector<16xf32>
    %32 = vector.multi_reduction <add>, %31, %cst_21 [1] : vector<16x128xf32> to vector<16xf32>
    %33 = vector.shape_cast %32 : vector<16xf32> to vector<16x1xf32>
    %34 = arith.addf %28, %33 : vector<16x1xf32>
    %c0_22 = arith.constant 0 : index
    %c0_23 = arith.constant 0 : index
    %35 = vector.load %arg19[%c0_22, %c0_23] : memref<16x1xf32, #tpu.memory_space<vmem>>, vector<16x1xf32>
    tpu.vector_store %arg19[%c0_22, %c0_23], %34 {strides = array<i32>} : memref<16x1xf32, #tpu.memory_space<vmem>>, vector<16x1xf32>,
    %c0_24 = arith.constant 0 : index
    %c0_25 = arith.constant 0 : index
    %36 = vector.load %arg18[%c0_24, %c0_25] : memref<16x1xf32, #tpu.memory_space<vmem>>, vector<16x1xf32>
    tpu.vector_store %arg18[%c0_24, %c0_25], %24 {strides = array<i32>} : memref<16x1xf32, #tpu.memory_space<vmem>>, vector<16x1xf32>,
    %c1_i32 = arith.constant 1 : i32
    %37 = arith.cmpi eq, %arg0, %c1_i32 : i32
    %38 = arith.extui %37 : i1 to i32
    %c0_i32_26 = arith.constant 0 : i32
    %39 = arith.cmpi ne, %38, %c0_i32_26 : i32
    scf.if %39 {
      %c0_27 = arith.constant 0 : index
      %c0_28 = arith.constant 0 : index
      %40 = vector.load %arg17[%c0_27, %c0_28] : memref<8x32xf32, #tpu.memory_space<vmem>>, vector<8x32xf32>
      %c0_29 = arith.constant 0 : index
      %c0_30 = arith.constant 0 : index
      %41 = vector.load %arg4[%c0_29, %c0_30] : memref<1x32xf32, #tpu.memory_space<vmem>>, vector<1x32xf32>
      %42 = vector.broadcast %41 : vector<1x32xf32> to vector<8x32xf32>
      %43 = arith.addf %40, %42 : vector<8x32xf32>
      %cst_31 = arith.constant dense<0.000000e+00> : vector<32xf32>
      %44 = vector.multi_reduction <add>, %43, %cst_31 [0] : vector<8x32xf32> to vector<32xf32>
      %45 = vector.shape_cast %44 : vector<32xf32> to vector<1x32xf32>
      %cst_32 = arith.constant 8.000000e+00 : f32
      %46 = vector.broadcast %cst_32 : f32 to vector<1x32xf32>
      %47 = arith.divf %45, %46 : vector<1x32xf32>
      %48 = vector.broadcast %47 : vector<1x32xf32> to vector<8x32xf32>
      %49 = arith.subf %43, %48 : vector<8x32xf32>
      %50 = vector.broadcast %47 : vector<1x32xf32> to vector<8x32xf32>
      %51 = arith.subf %43, %50 : vector<8x32xf32>
      %52 = arith.mulf %49, %51 : vector<8x32xf32>
      %cst_33 = arith.constant dense<0.000000e+00> : vector<32xf32>
      %53 = vector.multi_reduction <add>, %52, %cst_33 [0] : vector<8x32xf32> to vector<32xf32>
      %54 = vector.shape_cast %53 : vector<32xf32> to vector<1x32xf32>
      %cst_34 = arith.constant 8.000000e+00 : f32
      %55 = vector.broadcast %cst_34 : f32 to vector<1x32xf32>
      %56 = arith.divf %54, %55 : vector<1x32xf32>
      %57 = vector.broadcast %47 : vector<1x32xf32> to vector<8x32xf32>
      %58 = arith.subf %43, %57 : vector<8x32xf32>
      %cst_35 = arith.constant 9.99999974E-6 : f32
      %59 = vector.broadcast %cst_35 : f32 to vector<1x32xf32>
      %60 = arith.addf %56, %59 : vector<1x32xf32>
      %61 = math.rsqrt %60 : vector<1x32xf32>
      %62 = vector.broadcast %61 : vector<1x32xf32> to vector<8x32xf32>
      %63 = arith.mulf %58, %62 : vector<8x32xf32>
      %c0_36 = arith.constant 0 : index
      %c0_37 = arith.constant 0 : index
      %64 = vector.load %arg5[%c0_36, %c0_37] : memref<1x32xf32, #tpu.memory_space<vmem>>, vector<1x32xf32>
      %65 = vector.broadcast %64 : vector<1x32xf32> to vector<8x32xf32>
      %66 = arith.mulf %63, %65 : vector<8x32xf32>
      %c0_38 = arith.constant 0 : index
      %c0_39 = arith.constant 0 : index
      %67 = vector.load %arg6[%c0_38, %c0_39] : memref<1x32xf32, #tpu.memory_space<vmem>>, vector<1x32xf32>
      %68 = vector.broadcast %67 : vector<1x32xf32> to vector<8x32xf32>
      %69 = arith.addf %66, %68 : vector<8x32xf32>
      %cst_40 = arith.constant 0.000000e+00 : f32
      %70 = vector.broadcast %cst_40 : f32 to vector<8x32xf32>
      %71 = arith.maximumf %69, %70 : vector<8x32xf32>
      %72 = arith.truncf %71 : vector<8x32xf32> to vector<8x32xbf16>
      %c0_41 = arith.constant 0 : index
      %c0_42 = arith.constant 0 : index
      %73 = vector.load %arg7[%c0_41, %c0_42] : memref<32x32xbf16, #tpu.memory_space<vmem>>, vector<32x32xbf16>
      %cst_43 = arith.constant dense<0.000000e+00> : vector<8x32xf32>
      %74 = tpu.matmul %72, %73, %cst_43 {dimension_numbers = #tpu.dot_dimension_numbers<[1], [0], [0], [1], [0, 0, 1, 1], [], []>} : vector<8x32xbf16>, vector<32x32xbf16>, vector<8x32xf32> -> vector<8x32xf32>
      %c0_44 = arith.constant 0 : index
      %c0_45 = arith.constant 0 : index
      %75 = vector.load %arg8[%c0_44, %c0_45] : memref<1x32xf32, #tpu.memory_space<vmem>>, vector<1x32xf32>
      %76 = vector.broadcast %75 : vector<1x32xf32> to vector<8x32xf32>
      %77 = arith.addf %74, %76 : vector<8x32xf32>
      %cst_46 = arith.constant dense<0.000000e+00> : vector<32xf32>
      %78 = vector.multi_reduction <add>, %77, %cst_46 [0] : vector<8x32xf32> to vector<32xf32>
      %79 = vector.shape_cast %78 : vector<32xf32> to vector<1x32xf32>
      %cst_47 = arith.constant 8.000000e+00 : f32
      %80 = vector.broadcast %cst_47 : f32 to vector<1x32xf32>
      %81 = arith.divf %79, %80 : vector<1x32xf32>
      %82 = vector.broadcast %81 : vector<1x32xf32> to vector<8x32xf32>
      %83 = arith.subf %77, %82 : vector<8x32xf32>
      %84 = vector.broadcast %81 : vector<1x32xf32> to vector<8x32xf32>
      %85 = arith.subf %77, %84 : vector<8x32xf32>
      %86 = arith.mulf %83, %85 : vector<8x32xf32>
      %cst_48 = arith.constant dense<0.000000e+00> : vector<32xf32>
      %87 = vector.multi_reduction <add>, %86, %cst_48 [0] : vector<8x32xf32> to vector<32xf32>
      %88 = vector.shape_cast %87 : vector<32xf32> to vector<1x32xf32>
      %cst_49 = arith.constant 8.000000e+00 : f32
      %89 = vector.broadcast %cst_49 : f32 to vector<1x32xf32>
      %90 = arith.divf %88, %89 : vector<1x32xf32>
      %91 = vector.broadcast %81 : vector<1x32xf32> to vector<8x32xf32>
      %92 = arith.subf %77, %91 : vector<8x32xf32>
      %cst_50 = arith.constant 9.99999974E-6 : f32
      %93 = vector.broadcast %cst_50 : f32 to vector<1x32xf32>
      %94 = arith.addf %90, %93 : vector<1x32xf32>
      %95 = math.rsqrt %94 : vector<1x32xf32>
      %96 = vector.broadcast %95 : vector<1x32xf32> to vector<8x32xf32>
      %97 = arith.mulf %92, %96 : vector<8x32xf32>
      %c0_51 = arith.constant 0 : index
      %c0_52 = arith.constant 0 : index
      %98 = vector.load %arg9[%c0_51, %c0_52] : memref<1x32xf32, #tpu.memory_space<vmem>>, vector<1x32xf32>
      %99 = vector.broadcast %98 : vector<1x32xf32> to vector<8x32xf32>
      %100 = arith.mulf %97, %99 : vector<8x32xf32>
      %c0_53 = arith.constant 0 : index
      %c0_54 = arith.constant 0 : index
      %101 = vector.load %arg10[%c0_53, %c0_54] : memref<1x32xf32, #tpu.memory_space<vmem>>, vector<1x32xf32>
      %102 = vector.broadcast %101 : vector<1x32xf32> to vector<8x32xf32>
      %103 = arith.addf %100, %102 : vector<8x32xf32>
      %cst_55 = arith.constant 0.000000e+00 : f32
      %104 = vector.broadcast %cst_55 : f32 to vector<8x32xf32>
      %105 = arith.maximumf %103, %104 : vector<8x32xf32>
      %106 = arith.truncf %105 : vector<8x32xf32> to vector<8x32xbf16>
      %c0_56 = arith.constant 0 : index
      %c0_57 = arith.constant 0 : index
      %107 = vector.load %arg11[%c0_56, %c0_57] : memref<32x16xbf16, #tpu.memory_space<vmem>>, vector<32x16xbf16>
      %cst_58 = arith.constant dense<0.000000e+00> : vector<8x16xf32>
      %108 = tpu.matmul %106, %107, %cst_58 {dimension_numbers = #tpu.dot_dimension_numbers<[1], [0], [0], [1], [0, 0, 1, 1], [], []>} : vector<8x32xbf16>, vector<32x16xbf16>, vector<8x16xf32> -> vector<8x16xf32>
      %c0_59 = arith.constant 0 : index
      %c0_60 = arith.constant 0 : index
      %109 = vector.load %arg12[%c0_59, %c0_60] : memref<1x16xf32, #tpu.memory_space<vmem>>, vector<1x16xf32>
      %110 = vector.broadcast %109 : vector<1x16xf32> to vector<8x16xf32>
      %111 = arith.addf %108, %110 : vector<8x16xf32>
      %cst_61 = arith.constant dense<0xFF800000> : vector<8xf32>
      %112 = vector.multi_reduction <maximumf>, %111, %cst_61 [1] : vector<8x16xf32> to vector<8xf32>
      %113 = vector.shape_cast %112 : vector<8xf32> to vector<8x1xf32>
      %114 = vector.broadcast %113 : vector<8x1xf32> to vector<8x16xf32>
      %115 = arith.subf %111, %114 : vector<8x16xf32>
      %116 = math.exp %115 : vector<8x16xf32>
      %cst_62 = arith.constant dense<0.000000e+00> : vector<8xf32>
      %117 = vector.multi_reduction <add>, %116, %cst_62 [1] : vector<8x16xf32> to vector<8xf32>
      %118 = vector.shape_cast %117 : vector<8xf32> to vector<8x1xf32>
      %119 = vector.broadcast %118 : vector<8x1xf32> to vector<8x16xf32>
      %120 = arith.divf %116, %119 : vector<8x16xf32>
      %c0_63 = arith.constant 0 : index
      %c0_64 = arith.constant 0 : index
      %121 = vector.load %arg14[%c0_63, %c0_64] : memref<8x16xf32, #tpu.memory_space<vmem>>, vector<8x16xf32>
      tpu.vector_store %arg14[%c0_63, %c0_64], %120 {strides = array<i32>} : memref<8x16xf32, #tpu.memory_space<vmem>>, vector<8x16xf32>,
      %c0_65 = arith.constant 0 : index
      %c0_66 = arith.constant 0 : index
      %122 = vector.load %arg18[%c0_65, %c0_66] : memref<16x1xf32, #tpu.memory_space<vmem>>, vector<16x1xf32>
      %c0_67 = arith.constant 0 : index
      %c0_68 = arith.constant 0 : index
      %123 = vector.load %arg19[%c0_67, %c0_68] : memref<16x1xf32, #tpu.memory_space<vmem>>, vector<16x1xf32>
      %124 = math.log %123 : vector<16x1xf32>
      %125 = arith.addf %122, %124 : vector<16x1xf32>
      %c0_69 = arith.constant 0 : index
      %c0_70 = arith.constant 0 : index
      %126 = vector.load %arg15[%c0_69, %c0_70] : memref<16x1xf32, #tpu.memory_space<vmem>>, vector<16x1xf32>
      tpu.vector_store %arg15[%c0_69, %c0_70], %125 {strides = array<i32>} : memref<16x1xf32, #tpu.memory_space<vmem>>, vector<16x1xf32>,
    } else {
    }
    return
  }
  func.func @transform_0(%arg0: i32) -> (i32, i32) {
    %c0_i32 = arith.constant 0 : i32
    %c0_i32_0 = arith.constant 0 : i32
    return %c0_i32, %arg0 : i32, i32
  }
  func.func @transform_1(%arg0: i32) -> (i32, i32) {
    %c0_i32 = arith.constant 0 : i32
    %c0_i32_0 = arith.constant 0 : i32
    return %arg0, %c0_i32 : i32, i32
  }
  func.func @transform_2(%arg0: i32) -> (i32, i32) {
    %c0_i32 = arith.constant 0 : i32
    %c0_i32_0 = arith.constant 0 : i32
    return %c0_i32, %arg0 : i32, i32
  }
  func.func @transform_3(%arg0: i32) -> (i32, i32) {
    %c0_i32 = arith.constant 0 : i32
    %c0_i32_0 = arith.constant 0 : i32
    %c0_i32_1 = arith.constant 0 : i32
    return %c0_i32, %c0_i32_0 : i32, i32
  }
  func.func @transform_4(%arg0: i32) -> (i32, i32) {
    %c0_i32 = arith.constant 0 : i32
    %c0_i32_0 = arith.constant 0 : i32
    %c0_i32_1 = arith.constant 0 : i32
    return %c0_i32, %c0_i32_0 : i32, i32
  }
  func.func @transform_5(%arg0: i32) -> (i32, i32) {
    %c0_i32 = arith.constant 0 : i32
    %c0_i32_0 = arith.constant 0 : i32
    %c0_i32_1 = arith.constant 0 : i32
    return %c0_i32, %c0_i32_0 : i32, i32
  }
  func.func @transform_6(%arg0: i32) -> (i32, i32) {
    %c0_i32 = arith.constant 0 : i32
    %c0_i32_0 = arith.constant 0 : i32
    %c0_i32_1 = arith.constant 0 : i32
    return %c0_i32, %c0_i32_0 : i32, i32
  }
  func.func @transform_7(%arg0: i32) -> (i32, i32) {
    %c0_i32 = arith.constant 0 : i32
    %c0_i32_0 = arith.constant 0 : i32
    %c0_i32_1 = arith.constant 0 : i32
    return %c0_i32, %c0_i32_0 : i32, i32
  }
  func.func @transform_8(%arg0: i32) -> (i32, i32) {
    %c0_i32 = arith.constant 0 : i32
    %c0_i32_0 = arith.constant 0 : i32
    %c0_i32_1 = arith.constant 0 : i32
    return %c0_i32, %c0_i32_0 : i32, i32
  }
  func.func @transform_9(%arg0: i32) -> (i32, i32) {
    %c0_i32 = arith.constant 0 : i32
    %c0_i32_0 = arith.constant 0 : i32
    %c0_i32_1 = arith.constant 0 : i32
    return %c0_i32, %c0_i32_0 : i32, i32
  }
  func.func @transform_10(%arg0: i32) -> (i32, i32) {
    %c0_i32 = arith.constant 0 : i32
    %c0_i32_0 = arith.constant 0 : i32
    %c0_i32_1 = arith.constant 0 : i32
    return %c0_i32, %c0_i32_0 : i32, i32
  }
  func.func @transform_11(%arg0: i32) -> (i32, i32) {
    %c0_i32 = arith.constant 0 : i32
    %c0_i32_0 = arith.constant 0 : i32
    %c0_i32_1 = arith.constant 0 : i32
    return %c0_i32, %c0_i32_0 : i32, i32
  }
  func.func @transform_12(%arg0: i32) -> (i32, i32) {
    %c0_i32 = arith.constant 0 : i32
    %c0_i32_0 = arith.constant 0 : i32
    %c0_i32_1 = arith.constant 0 : i32
    return %c0_i32, %c0_i32_0 : i32, i32
  }
  func.func @transform_13(%arg0: i32) -> (i32, i32) {
    %c0_i32 = arith.constant 0 : i32
    %c0_i32_0 = arith.constant 0 : i32
    %c0_i32_1 = arith.constant 0 : i32
    return %c0_i32, %c0_i32_0 : i32, i32
  }
  func.func @transform_14(%arg0: i32) -> (i32, i32) {
    %c0_i32 = arith.constant 0 : i32
    %c0_i32_0 = arith.constant 0 : i32
    %c0_i32_1 = arith.constant 0 : i32
    return %c0_i32, %c0_i32_0 : i32, i32
  }
  func.func @transform_15(%arg0: i32) -> (i32, i32) {
    %c0_i32 = arith.constant 0 : i32
    %c0_i32_0 = arith.constant 0 : i32
    return %c0_i32, %arg0 : i32, i32
  }
}

</mosaic_0001>

<llo_original>
// kernel: tpu_custom_call.1
$region0: #{tpu_custom_call.1}
  #allocation0 [shape = 'u32[]', space=smem, size = 0x4, offset = 0x4, fixed_abs, tag = 'smem constant byte address 0x4 - core index']
  #allocation1 [shape = 'u32[72,128]{1,0:T(1,128)}', space=vmem, size = 0x9000, scoped, tag = 'internal scratch']
  #allocation2 [shape = 'f32[8,32]{1,0:T(8,128)}', space=vmem, size = 0x1000, scoped, tag = 'scratch operand']
  #allocation3 [shape = 'f32[16,1]{1,0:T(8,128)}', space=vmem, size = 0x2000, scoped, tag = 'scratch operand']
  #allocation4 [shape = 'f32[16,1]{1,0:T(8,128)}', space=vmem, size = 0x2000, scoped, tag = 'scratch operand']
  %s0 = inlined_call_operand.vmem [shape: bf16[8,256], index: 0, kind: input, shape index: {}]
  %s1 = inlined_call_operand.vmem [shape: bf16[256,32], index: 1, kind: input, shape index: {}]
  %s2 = inlined_call_operand.vmem [shape: bf16[128,256], index: 2, kind: input, shape index: {}]
  %s3 = inlined_call_operand.vmem [shape: f32[1,32], index: 3, kind: input, shape index: {}]
  %s4 = inlined_call_operand.vmem [shape: f32[1,32], index: 4, kind: input, shape index: {}]
  %s5 = inlined_call_operand.vmem [shape: f32[1,32], index: 5, kind: input, shape index: {}]
  %s6 = inlined_call_operand.vmem [shape: bf16[32,32], index: 6, kind: input, shape index: {}]
  %s7 = inlined_call_operand.vmem [shape: f32[1,32], index: 7, kind: input, shape index: {}]
  %s8 = inlined_call_operand.vmem [shape: f32[1,32], index: 8, kind: input, shape index: {}]
  %s9 = inlined_call_operand.vmem [shape: f32[1,32], index: 9, kind: input, shape index: {}]
  %s10 = inlined_call_operand.vmem [shape: bf16[32,16], index: 10, kind: input, shape index: {}]
  %s11 = inlined_call_operand.vmem [shape: f32[1,16], index: 11, kind: input, shape index: {}]
  %s12 = inlined_call_operand.vmem [shape: bf16[16,128], index: 12, kind: input, shape index: {}]
  %s13 = inlined_call_operand.hbm [shape: f32[8,16], index: 13, kind: output, shape index: {0}]
  %s14 = inlined_call_operand.vmem [shape: f32[16,1], index: 14, kind: output, shape index: {1}]
  %s15 = inlined_call_operand.hbm [shape: f32[16,256], index: 15, kind: output, shape index: {2}]
  %16 = xla_tuple %s13, %s14, %s15
  %s17 = sld [smem:[#allocation0]]
  $region150: #{tpu_custom_call.1} parent=0
    _
  %s19 = ssub.s32 1, %s17
  %s20 = scalar_select 0, %s19, %s17
  $region1: #{tpu_custom_call.1} parent=0
    #allocation5 [shape = 'u8[65536]{0}', space=vmem, size = 0x10000, scoped, tag = 'input window, operand 2']
    #allocation6 [shape = 'u8[4096]{0}', space=vmem, size = 0x1000, scoped, tag = 'output window, operand 0, single buffered']
    #allocation7 [shape = 's32[2]{0}', space=sflag, size = 0x8, scoped, tag = 'scoped memory for tpu_custom_call.1']
    #allocation8 [shape = 'u8[16384]{0}', space=vmem, size = 0x4000, scoped, tag = 'output window, operand 2']
    #allocation9 [shape = 's32[2]{0}', space=sflag, size = 0x8, scoped, tag = 'scoped memory for tpu_custom_call.1']
    %21 = vsyncpa [#allocation7], 0
    %22 = vsyncpa [#allocation9], 0
    %s23 = scalar_lea.sflag [#allocation9], 1
    %24 = vsyncpa %s23, 0
    loop: start=0, step=1, limit=4
    $region2: #{tpu_custom_call.1} parent=1 // loop_pre_header
      _
    $region3: #{tpu_custom_call.1} parent=1 // loop_header
      %s26 = sphi 0, %s30
      %p27 = scmp.ge.s32.totalorder %s26, 4
      %s36 = sphi 0, %s38
      %s39 = sphi 0, %s36
      %s40 = sphi 0, %s39
      %s56 = sphi 0, %s40
      %s62 = sphi 0, %s64
      %s65 = sphi 0, %s62
      %s66 = sphi 0, %s65
      %s82 = sphi 0, %s66
      %s88 = sphi 0, %s90
      %s91 = sphi 0, %s88
      %s92 = sphi 0, %s91
      %s108 = sphi 0, %s92
      %s112 = sphi 0, %s112
      %s114 = sphi 0, %s112
      %s115 = sphi 0, %s114
      %s129 = sphi 0, %s115
      %s133 = sphi 0, %s133
      %s135 = sphi 0, %s133
      %s136 = sphi 0, %s135
      %s150 = sphi 0, %s136
      %s154 = sphi 0, %s154
      %s156 = sphi 0, %s154
      %s157 = sphi 0, %s156
      %s171 = sphi 0, %s157
      %s175 = sphi 0, %s175
      %s177 = sphi 0, %s175
      %s178 = sphi 0, %s177
      %s192 = sphi 0, %s178
      %s196 = sphi 0, %s196
      %s198 = sphi 0, %s196
      %s199 = sphi 0, %s198
      %s213 = sphi 0, %s199
      %s217 = sphi 0, %s217
      %s219 = sphi 0, %s217
      %s220 = sphi 0, %s219
      %s234 = sphi 0, %s220
      %s238 = sphi 0, %s238
      %s240 = sphi 0, %s238
      %s241 = sphi 0, %s240
      %s255 = sphi 0, %s241
      %s259 = sphi 0, %s259
      %s261 = sphi 0, %s259
      %s262 = sphi 0, %s261
      %s276 = sphi 0, %s262
      %s280 = sphi 0, %s280
      %s282 = sphi 0, %s280
      %s283 = sphi 0, %s282
      %s297 = sphi 0, %s283
      %s301 = sphi 0, %s301
      %s303 = sphi 0, %s301
      %s304 = sphi 0, %s303
      %s318 = sphi 0, %s304
      %s322 = sphi 0, %s322
      %s324 = sphi 0, %s322
      %s325 = sphi 0, %s324
      %s339 = sphi 0, %s325
      %s343 = sphi 0, %s343
      %s345 = sphi 0, %s343
      %s346 = sphi 0, %s345
      %s360 = sphi 0, %s346
      %s366 = sphi 0, %s368
      %s369 = sphi 0, %s366
      %s370 = sphi 0, %s369
      %s386 = sphi 0, %s370
    $region4: #{tpu_custom_call.1} parent=1 // loop_header_branch
      %29 = sbr.rel (%p27) target = $region8
    $region5: #{tpu_custom_call.1} parent=1 // loop_body
      %s31 = ssub.s32 %s26, 1
      %s32 = ssub.s32 %s26, 2
      %s33 = sadd.s32 %s26, 1
      %s34 = ssub.s32 %s26, %s33
      %p35 = scmp.eq.s32.totalorder %s34, 0
      %s37 = sadd.s32 %s36, 1
      %s38 = scalar_select %p35, %s36, %s37
      %p41 = pneg %p35
      %p42 = scmp.eq.s32.totalorder %s26, 1
      %p43 = por %p41, %p42
      %p44 = scmp.ne.s32.totalorder %s36, %s39
      %p45 = scmp.eq.s32.totalorder %s26, 0
      %p46 = por %p44, %p45
      %p47 = scmp.ne.s32.totalorder %s36, %s39
      %p48 = scmp.eq.s32.totalorder %s31, 1
      %p49 = por %p47, %p48
      %p50 = scmp.ne.s32.totalorder %s39, %s40
      %p51 = scmp.eq.s32.totalorder %s31, 0
      %p52 = por %p50, %p51
      %p53 = scmp.ne.s32.totalorder %s39, %s40
      %p54 = scmp.eq.s32.totalorder %s32, 1
      %p55 = por %p53, %p54
      %p57 = scmp.ne.s32.totalorder %s40, %s56
      %p58 = scmp.eq.s32.totalorder %s32, 0
      %p59 = por %p57, %p58
      %s60 = ssub.s32 %s26, %s33
      %p61 = scmp.eq.s32.totalorder %s60, 0
      %s63 = sadd.s32 %s62, 1
      %s64 = scalar_select %p61, %s62, %s63
      %p67 = pneg %p61
      %p68 = scmp.eq.s32.totalorder %s26, 1
      %p69 = por %p67, %p68
      %p70 = scmp.ne.s32.totalorder %s62, %s65
      %p71 = scmp.eq.s32.totalorder %s26, 0
      %p72 = por %p70, %p71
      %p73 = scmp.ne.s32.totalorder %s62, %s65
      %p74 = scmp.eq.s32.totalorder %s31, 1
      %p75 = por %p73, %p74
      %p76 = scmp.ne.s32.totalorder %s65, %s66
      %p77 = scmp.eq.s32.totalorder %s31, 0
      %p78 = por %p76, %p77
      %p79 = scmp.ne.s32.totalorder %s65, %s66
      %p80 = scmp.eq.s32.totalorder %s32, 1
      %p81 = por %p79, %p80
      %p83 = scmp.ne.s32.totalorder %s66, %s82
      %p84 = scmp.eq.s32.totalorder %s32, 0
      %p85 = por %p83, %p84
      %s86 = ssub.s32 %s26, %s33
      %p87 = scmp.eq.s32.totalorder %s86, 0
      %s89 = sadd.s32 %s88, 1
      %s90 = scalar_select %p87, %s88, %s89
      %p93 = pneg %p87
      %p94 = scmp.eq.s32.totalorder %s26, 1
      %p95 = por %p93, %p94
      %p96 = scmp.ne.s32.totalorder %s88, %s91
      %p97 = scmp.eq.s32.totalorder %s26, 0
      %p98 = por %p96, %p97
      %p99 = scmp.ne.s32.totalorder %s88, %s91
      %p100 = scmp.eq.s32.totalorder %s31, 1
      %p101 = por %p99, %p100
      %p102 = scmp.ne.s32.totalorder %s91, %s92
      %p103 = scmp.eq.s32.totalorder %s31, 0
      %p104 = por %p102, %p103
      %p105 = scmp.ne.s32.totalorder %s91, %s92
      %p106 = scmp.eq.s32.totalorder %s32, 1
      %p107 = por %p105, %p106
      %p109 = scmp.ne.s32.totalorder %s92, %s108
      %p110 = scmp.eq.s32.totalorder %s32, 0
      %p111 = por %p109, %p110
      %s113 = sadd.s32 %s112, 1
      %p116 = scmp.eq.s32.totalorder %s26, 1
      %p117 = scmp.ne.s32.totalorder %s112, %s114
      %p118 = scmp.eq.s32.totalorder %s26, 0
      %p119 = por %p117, %p118
      %p120 = scmp.ne.s32.totalorder %s112, %s114
      %p121 = scmp.eq.s32.totalorder %s31, 1
      %p122 = por %p120, %p121
      %p123 = scmp.ne.s32.totalorder %s114, %s115
      %p124 = scmp.eq.s32.totalorder %s31, 0
      %p125 = por %p123, %p124
      %p126 = scmp.ne.s32.totalorder %s114, %s115
      %p127 = scmp.eq.s32.totalorder %s32, 1
      %p128 = por %p126, %p127
      %p130 = scmp.ne.s32.totalorder %s115, %s129
      %p131 = scmp.eq.s32.totalorder %s32, 0
      %p132 = por %p130, %p131
      %s134 = sadd.s32 %s133, 1
      %p137 = scmp.eq.s32.totalorder %s26, 1
      %p138 = scmp.ne.s32.totalorder %s133, %s135
      %p139 = scmp.eq.s32.totalorder %s26, 0
      %p140 = por %p138, %p139
      %p141 = scmp.ne.s32.totalorder %s133, %s135
      %p142 = scmp.eq.s32.totalorder %s31, 1
      %p143 = por %p141, %p142
      %p144 = scmp.ne.s32.totalorder %s135, %s136
      %p145 = scmp.eq.s32.totalorder %s31, 0
      %p146 = por %p144, %p145
      %p147 = scmp.ne.s32.totalorder %s135, %s136
      %p148 = scmp.eq.s32.totalorder %s32, 1
      %p149 = por %p147, %p148
      %p151 = scmp.ne.s32.totalorder %s136, %s150
      %p152 = scmp.eq.s32.totalorder %s32, 0
      %p153 = por %p151, %p152
      %s155 = sadd.s32 %s154, 1
      %p158 = scmp.eq.s32.totalorder %s26, 1
      %p159 = scmp.ne.s32.totalorder %s154, %s156
      %p160 = scmp.eq.s32.totalorder %s26, 0
      %p161 = por %p159, %p160
      %p162 = scmp.ne.s32.totalorder %s154, %s156
      %p163 = scmp.eq.s32.totalorder %s31, 1
      %p164 = por %p162, %p163
      %p165 = scmp.ne.s32.totalorder %s156, %s157
      %p166 = scmp.eq.s32.totalorder %s31, 0
      %p167 = por %p165, %p166
      %p168 = scmp.ne.s32.totalorder %s156, %s157
      %p169 = scmp.eq.s32.totalorder %s32, 1
      %p170 = por %p168, %p169
      %p172 = scmp.ne.s32.totalorder %s157, %s171
      %p173 = scmp.eq.s32.totalorder %s32, 0
      %p174 = por %p172, %p173
      %s176 = sadd.s32 %s175, 1
      %p179 = scmp.eq.s32.totalorder %s26, 1
      %p180 = scmp.ne.s32.totalorder %s175, %s177
      %p181 = scmp.eq.s32.totalorder %s26, 0
      %p182 = por %p180, %p181
      %p183 = scmp.ne.s32.totalorder %s175, %s177
      %p184 = scmp.eq.s32.totalorder %s31, 1
      %p185 = por %p183, %p184
      %p186 = scmp.ne.s32.totalorder %s177, %s178
      %p187 = scmp.eq.s32.totalorder %s31, 0
      %p188 = por %p186, %p187
      %p189 = scmp.ne.s32.totalorder %s177, %s178
      %p190 = scmp.eq.s32.totalorder %s32, 1
      %p191 = por %p189, %p190
      %p193 = scmp.ne.s32.totalorder %s178, %s192
      %p194 = scmp.eq.s32.totalorder %s32, 0
      %p195 = por %p193, %p194
      %s197 = sadd.s32 %s196, 1
      %p200 = scmp.eq.s32.totalorder %s26, 1
      %p201 = scmp.ne.s32.totalorder %s196, %s198
      %p202 = scmp.eq.s32.totalorder %s26, 0
      %p203 = por %p201, %p202
      %p204 = scmp.ne.s32.totalorder %s196, %s198
      %p205 = scmp.eq.s32.totalorder %s31, 1
      %p206 = por %p204, %p205
      %p207 = scmp.ne.s32.totalorder %s198, %s199
      %p208 = scmp.eq.s32.totalorder %s31, 0
      %p209 = por %p207, %p208
      %p210 = scmp.ne.s32.totalorder %s198, %s199
      %p211 = scmp.eq.s32.totalorder %s32, 1
      %p212 = por %p210, %p211
      %p214 = scmp.ne.s32.totalorder %s199, %s213
      %p215 = scmp.eq.s32.totalorder %s32, 0
      %p216 = por %p214, %p215
      %s218 = sadd.s32 %s217, 1
      %p221 = scmp.eq.s32.totalorder %s26, 1
      %p222 = scmp.ne.s32.totalorder %s217, %s219
      %p223 = scmp.eq.s32.totalorder %s26, 0
      %p224 = por %p222, %p223
      %p225 = scmp.ne.s32.totalorder %s217, %s219
      %p226 = scmp.eq.s32.totalorder %s31, 1
      %p227 = por %p225, %p226
      %p228 = scmp.ne.s32.totalorder %s219, %s220
      %p229 = scmp.eq.s32.totalorder %s31, 0
      %p230 = por %p228, %p229
      %p231 = scmp.ne.s32.totalorder %s219, %s220
      %p232 = scmp.eq.s32.totalorder %s32, 1
      %p233 = por %p231, %p232
      %p235 = scmp.ne.s32.totalorder %s220, %s234
      %p236 = scmp.eq.s32.totalorder %s32, 0
      %p237 = por %p235, %p236
      %s239 = sadd.s32 %s238, 1
      %p242 = scmp.eq.s32.totalorder %s26, 1
      %p243 = scmp.ne.s32.totalorder %s238, %s240
      %p244 = scmp.eq.s32.totalorder %s26, 0
      %p245 = por %p243, %p244
      %p246 = scmp.ne.s32.totalorder %s238, %s240
      %p247 = scmp.eq.s32.totalorder %s31, 1
      %p248 = por %p246, %p247
      %p249 = scmp.ne.s32.totalorder %s240, %s241
      %p250 = scmp.eq.s32.totalorder %s31, 0
      %p251 = por %p249, %p250
      %p252 = scmp.ne.s32.totalorder %s240, %s241
      %p253 = scmp.eq.s32.totalorder %s32, 1
      %p254 = por %p252, %p253
      %p256 = scmp.ne.s32.totalorder %s241, %s255
      %p257 = scmp.eq.s32.totalorder %s32, 0
      %p258 = por %p256, %p257
      %s260 = sadd.s32 %s259, 1
      %p263 = scmp.eq.s32.totalorder %s26, 1
      %p264 = scmp.ne.s32.totalorder %s259, %s261
      %p265 = scmp.eq.s32.totalorder %s26, 0
      %p266 = por %p264, %p265
      %p267 = scmp.ne.s32.totalorder %s259, %s261
      %p268 = scmp.eq.s32.totalorder %s31, 1
      %p269 = por %p267, %p268
      %p270 = scmp.ne.s32.totalorder %s261, %s262
      %p271 = scmp.eq.s32.totalorder %s31, 0
      %p272 = por %p270, %p271
      %p273 = scmp.ne.s32.totalorder %s261, %s262
      %p274 = scmp.eq.s32.totalorder %s32, 1
      %p275 = por %p273, %p274
      %p277 = scmp.ne.s32.totalorder %s262, %s276
      %p278 = scmp.eq.s32.totalorder %s32, 0
      %p279 = por %p277, %p278
      %s281 = sadd.s32 %s280, 1
      %p284 = scmp.eq.s32.totalorder %s26, 1
      %p285 = scmp.ne.s32.totalorder %s280, %s282
      %p286 = scmp.eq.s32.totalorder %s26, 0
      %p287 = por %p285, %p286
      %p288 = scmp.ne.s32.totalorder %s280, %s282
      %p289 = scmp.eq.s32.totalorder %s31, 1
      %p290 = por %p288, %p289
      %p291 = scmp.ne.s32.totalorder %s282, %s283
      %p292 = scmp.eq.s32.totalorder %s31, 0
      %p293 = por %p291, %p292
      %p294 = scmp.ne.s32.totalorder %s282, %s283
      %p295 = scmp.eq.s32.totalorder %s32, 1
      %p296 = por %p294, %p295
      %p298 = scmp.ne.s32.totalorder %s283, %s297
      %p299 = scmp.eq.s32.totalorder %s32, 0
      %p300 = por %p298, %p299
      %s302 = sadd.s32 %s301, 1
      %p305 = scmp.eq.s32.totalorder %s26, 1
      %p306 = scmp.ne.s32.totalorder %s301, %s303
      %p307 = scmp.eq.s32.totalorder %s26, 0
      %p308 = por %p306, %p307
      %p309 = scmp.ne.s32.totalorder %s301, %s303
      %p310 = scmp.eq.s32.totalorder %s31, 1
      %p311 = por %p309, %p310
      %p312 = scmp.ne.s32.totalorder %s303, %s304
      %p313 = scmp.eq.s32.totalorder %s31, 0
      %p314 = por %p312, %p313
      %p315 = scmp.ne.s32.totalorder %s303, %s304
      %p316 = scmp.eq.s32.totalorder %s32, 1
      %p317 = por %p315, %p316
      %p319 = scmp.ne.s32.totalorder %s304, %s318
      %p320 = scmp.eq.s32.totalorder %s32, 0
      %p321 = por %p319, %p320
      %s323 = sadd.s32 %s322, 1
      %p326 = scmp.eq.s32.totalorder %s26, 1
      %p327 = scmp.ne.s32.totalorder %s322, %s324
      %p328 = scmp.eq.s32.totalorder %s26, 0
      %p329 = por %p327, %p328
      %p330 = scmp.ne.s32.totalorder %s322, %s324
      %p331 = scmp.eq.s32.totalorder %s31, 1
      %p332 = por %p330, %p331
      %p333 = scmp.ne.s32.totalorder %s324, %s325
      %p334 = scmp.eq.s32.totalorder %s31, 0
      %p335 = por %p333, %p334
      %p336 = scmp.ne.s32.totalorder %s324, %s325
      %p337 = scmp.eq.s32.totalorder %s32, 1
      %p338 = por %p336, %p337
      %p340 = scmp.ne.s32.totalorder %s325, %s339
      %p341 = scmp.eq.s32.totalorder %s32, 0
      %p342 = por %p340, %p341
      %s344 = sadd.s32 %s343, 1
      %p347 = scmp.eq.s32.totalorder %s26, 1
      %p348 = scmp.ne.s32.totalorder %s343, %s345
      %p349 = scmp.eq.s32.totalorder %s26, 0
      %p350 = por %p348, %p349
      %p351 = scmp.ne.s32.totalorder %s343, %s345
      %p352 = scmp.eq.s32.totalorder %s31, 1
      %p353 = por %p351, %p352
      %p354 = scmp.ne.s32.totalorder %s345, %s346
      %p355 = scmp.eq.s32.totalorder %s31, 0
      %p356 = por %p354, %p355
      %p357 = scmp.ne.s32.totalorder %s345, %s346
      %p358 = scmp.eq.s32.totalorder %s32, 1
      %p359 = por %p357, %p358
      %p361 = scmp.ne.s32.totalorder %s346, %s360
      %p362 = scmp.eq.s32.totalorder %s32, 0
      %p363 = por %p361, %p362
      %s364 = ssub.s32 %s26, %s33
      %p365 = scmp.eq.s32.totalorder %s364, 0
      %s367 = sadd.s32 %s366, 1
      %s368 = scalar_select %p365, %s366, %s367
      %p371 = pneg %p365
      %p372 = scmp.eq.s32.totalorder %s26, 1
      %p373 = por %p371, %p372
      %p374 = scmp.ne.s32.totalorder %s366, %s369
      %p375 = scmp.eq.s32.totalorder %s26, 0
      %p376 = por %p374, %p375
      %p377 = scmp.ne.s32.totalorder %s366, %s369
      %p378 = scmp.eq.s32.totalorder %s31, 1
      %p379 = por %p377, %p378
      %p380 = scmp.ne.s32.totalorder %s369, %s370
      %p381 = scmp.eq.s32.totalorder %s31, 0
      %p382 = por %p380, %p381
      %p383 = scmp.ne.s32.totalorder %s369, %s370
      %p384 = scmp.eq.s32.totalorder %s32, 1
      %p385 = por %p383, %p384
      %p387 = scmp.ne.s32.totalorder %s370, %s386
      %p388 = scmp.eq.s32.totalorder %s32, 0
      %p389 = por %p387, %p388
      %p390 = scmp.le.s32.totalorder 1, %s26
      %p391 = scmp.lt.s32.totalorder %s26, 3
      %p392 = pnand %p390, %p391
      %p393 = pneg %p392
      // Predicated region
      $region9: #{tpu_custom_call.1} parent=5 // pred_check
        _
      $region10: #{tpu_custom_call.1} parent=5 // pred_check_branch
        %395 = sbr.rel (%p392) target = $region12
      $region11: #{tpu_custom_call.1} parent=5 // pred_region
        %s396 = ssub.s32 %s26, 1
        // Predicated region
        $region13: #{tpu_custom_call.1} parent=11 // pred_check
          %p397 = pneg %p125
        $region14: #{tpu_custom_call.1} parent=11 // pred_check_branch
          %399 = sbr.rel (%p397) target = $region16
        $region15: #{tpu_custom_call.1} parent=11 // pred_region
          _
        $region16: #{tpu_custom_call.1} parent=11 // pred_fallthru
          _
        // Predicated region
        $region17: #{tpu_custom_call.1} parent=11 // pred_check
          %p400 = pneg %p146
        $region18: #{tpu_custom_call.1} parent=11 // pred_check_branch
          %402 = sbr.rel (%p400) target = $region20
        $region19: #{tpu_custom_call.1} parent=11 // pred_region
          _
        $region20: #{tpu_custom_call.1} parent=11 // pred_fallthru
          _
        // Predicated region
        $region21: #{tpu_custom_call.1} parent=11 // pred_check
          %p403 = pneg %p167
        $region22: #{tpu_custom_call.1} parent=11 // pred_check_branch
          %405 = sbr.rel (%p403) target = $region24
        $region23: #{tpu_custom_call.1} parent=11 // pred_region
          _
        $region24: #{tpu_custom_call.1} parent=11 // pred_fallthru
          _
        // Predicated region
        $region25: #{tpu_custom_call.1} parent=11 // pred_check
          %p406 = pneg %p188
        $region26: #{tpu_custom_call.1} parent=11 // pred_check_branch
          %408 = sbr.rel (%p406) target = $region28
        $region27: #{tpu_custom_call.1} parent=11 // pred_region
          _
        $region28: #{tpu_custom_call.1} parent=11 // pred_fallthru
          _
        // Predicated region
        $region29: #{tpu_custom_call.1} parent=11 // pred_check
          %p409 = pneg %p209
        $region30: #{tpu_custom_call.1} parent=11 // pred_check_branch
          %411 = sbr.rel (%p409) target = $region32
        $region31: #{tpu_custom_call.1} parent=11 // pred_region
          _
        $region32: #{tpu_custom_call.1} parent=11 // pred_fallthru
          _
        // Predicated region
        $region33: #{tpu_custom_call.1} parent=11 // pred_check
          %p412 = pneg %p230
        $region34: #{tpu_custom_call.1} parent=11 // pred_check_branch
          %414 = sbr.rel (%p412) target = $region36
        $region35: #{tpu_custom_call.1} parent=11 // pred_region
          _
        $region36: #{tpu_custom_call.1} parent=11 // pred_fallthru
          _
        // Predicated region
        $region37: #{tpu_custom_call.1} parent=11 // pred_check
          %p415 = pneg %p251
        $region38: #{tpu_custom_call.1} parent=11 // pred_check_branch
          %417 = sbr.rel (%p415) target = $region40
        $region39: #{tpu_custom_call.1} parent=11 // pred_region
          _
        $region40: #{tpu_custom_call.1} parent=11 // pred_fallthru
          _
        // Predicated region
        $region41: #{tpu_custom_call.1} parent=11 // pred_check
          %p418 = pneg %p272
        $region42: #{tpu_custom_call.1} parent=11 // pred_check_branch
          %420 = sbr.rel (%p418) target = $region44
        $region43: #{tpu_custom_call.1} parent=11 // pred_region
          _
        $region44: #{tpu_custom_call.1} parent=11 // pred_fallthru
          _
        // Predicated region
        $region45: #{tpu_custom_call.1} parent=11 // pred_check
          %p421 = pneg %p293
        $region46: #{tpu_custom_call.1} parent=11 // pred_check_branch
          %423 = sbr.rel (%p421) target = $region48
        $region47: #{tpu_custom_call.1} parent=11 // pred_region
          _
        $region48: #{tpu_custom_call.1} parent=11 // pred_fallthru
          _
        // Predicated region
        $region49: #{tpu_custom_call.1} parent=11 // pred_check
          %p424 = pneg %p314
        $region50: #{tpu_custom_call.1} parent=11 // pred_check_branch
          %426 = sbr.rel (%p424) target = $region52
        $region51: #{tpu_custom_call.1} parent=11 // pred_region
          _
        $region52: #{tpu_custom_call.1} parent=11 // pred_fallthru
          _
      $region12: #{tpu_custom_call.1} parent=5 // pred_fallthru
        _
      %p427 = scmp.lt.s32.totalorder %s26, 2
      // Predicated region
      $region53: #{tpu_custom_call.1} parent=5 // pred_check
        %p428 = pneg %p427
      $region54: #{tpu_custom_call.1} parent=5 // pred_check_branch
        %430 = sbr.rel (%p428) target = $region56
      $region55: #{tpu_custom_call.1} parent=5 // pred_region
        // Predicated region
        $region57: #{tpu_custom_call.1} parent=55 // pred_check
          %p431 = pneg %p46
        $region58: #{tpu_custom_call.1} parent=55 // pred_check_branch
          %433 = sbr.rel (%p431) target = $region60
        $region59: #{tpu_custom_call.1} parent=55 // pred_region
          %p434 = scmp.lt.s32.totalorder %s26, 1
          %s435 = scalar_select %p434, %s26, 1
          %s436 = smul.addr %s435, 4
          %s437 = scalar_lea.vmem %s0, %s436
        $region60: #{tpu_custom_call.1} parent=55 // pred_fallthru
          _
        // Predicated region
        $region61: #{tpu_custom_call.1} parent=55 // pred_check
          %p438 = pneg %p72
        $region62: #{tpu_custom_call.1} parent=55 // pred_check_branch
          %440 = sbr.rel (%p438) target = $region64
        $region63: #{tpu_custom_call.1} parent=55 // pred_region
          %s441 = smul.u32 16, %s26
          %p442 = scmp.lt.s32.totalorder %s441, 31
          %s443 = scalar_select %p442, %s441, 31
          %s444 = smul.addr %s443, 4
          %s445 = scalar_lea.vmem %s1, %s444
          %s446 = smul.u32 16, %s26
        $region64: #{tpu_custom_call.1} parent=55 // pred_fallthru
          _
        // Predicated region
        $region65: #{tpu_custom_call.1} parent=55 // pred_check
          %p447 = pneg %p98
        $region66: #{tpu_custom_call.1} parent=55 // pred_check_branch
          %449 = sbr.rel (%p447) target = $region68
        $region67: #{tpu_custom_call.1} parent=55 // pred_region
          %s450 = sand.u32 %s88, 1
          %s451 = sand.u32 %s88, 1
          %s452 = smul.addr %s451, 64
          %s453 = scalar_lea.vmem [#allocation5], %s452
          %s454 = smul.addr %s26, 4
          %s455 = scalar_lea.vmem %s2, %s454
          // Predicated region
          $region69: #{tpu_custom_call.1} parent=67 // pred_check
            _
          $region70: #{tpu_custom_call.1} parent=67 // pred_check_branch
            %457 = sbr.rel (0) target = $region72
          $region71: #{tpu_custom_call.1} parent=67 // pred_region
            // Predicated region
            $region73: #{tpu_custom_call.1} parent=71 // pred_check
              _
            $region74: #{tpu_custom_call.1} parent=71 // pred_check_branch
              %459 = sbr.rel target = $region76
            $region75: #{tpu_custom_call.1} parent=71 // pred_region
              // Predicated region
              $region88: #{tpu_custom_call.1} parent=75 // pred_check
                _
              $region89: #{tpu_custom_call.1} parent=75 // pred_check_branch
                %505 = sbr.rel (0) target = $region91
              $region90: #{tpu_custom_call.1} parent=75 // pred_region
                loop: start=0, step=1, limit=1
                $region92: #{tpu_custom_call.1} parent=90 // loop_pre_header
                  _
                $region93: #{tpu_custom_call.1} parent=90 // loop_header
                  %s507 = sphi 0, %s511
                  %p508 = scmp.ge.s32.totalorder %s507, 1
                  %s512 = sphi %s455, %s455
                  %s513 = sphi %s453, %s453
                $region94: #{tpu_custom_call.1} parent=90 // loop_header_branch
                  %510 = sbr.rel (%p508) target = $region98
                $region95: #{tpu_custom_call.1} parent=90 // loop_body
                  _
                $region96: #{tpu_custom_call.1} parent=90 // loop_footer
                  %s511 = sadd.s32 1, %s507
                $region97: #{tpu_custom_call.1} parent=90 // loop_footer_branch
                  %506 = sbr.rel target = $region93
                $region98: #{tpu_custom_call.1} parent=90 // loop_exit
                  _
                %s515 = ssub.s32 16, 1
                loop: start=0, step=1, limit=1
                $region99: #{tpu_custom_call.1} parent=90 // loop_pre_header
                  _
                $region100: #{tpu_custom_call.1} parent=90 // loop_header
                  %s517 = sphi 0, %s521
                  %p518 = scmp.ge.s32.totalorder %s517, 1
                  %s522 = sphi %s455, %s455
                  %s523 = sphi %s453, %s453
                $region101: #{tpu_custom_call.1} parent=90 // loop_header_branch
                  %520 = sbr.rel (%p518) target = $region105
                $region102: #{tpu_custom_call.1} parent=90 // loop_body
                  %v524 = vld [vmem:[%s522] sm:%s515]
                  %525 = vst [vmem:[%s523] sm:%s515] %v524
                  %v526 = vld [vmem:[%s522 + $0x8] sm:%s515]
                  %527 = vst [vmem:[%s523 + $0x4] sm:%s515] %v526
                  %v528 = vld [vmem:[%s522 + $0x10] sm:%s515]
                  %529 = vst [vmem:[%s523 + $0x8] sm:%s515] %v528
                  %v530 = vld [vmem:[%s522 + $0x18] sm:%s515]
                  %531 = vst [vmem:[%s523 + $0xc] sm:%s515] %v530
                  %v532 = vld [vmem:[%s522 + $0x20] sm:%s515]
                  %533 = vst [vmem:[%s523 + $0x10] sm:%s515] %v532
                  %v534 = vld [vmem:[%s522 + $0x28] sm:%s515]
                  %535 = vst [vmem:[%s523 + $0x14] sm:%s515] %v534
                  %v536 = vld [vmem:[%s522 + $0x30] sm:%s515]
                  %537 = vst [vmem:[%s523 + $0x18] sm:%s515] %v536
                  %v538 = vld [vmem:[%s522 + $0x38] sm:%s515]
                  %539 = vst [vmem:[%s523 + $0x1c] sm:%s515] %v538
                  %v540 = vld [vmem:[%s522 + $0x40] sm:%s515]
                  %541 = vst [vmem:[%s523 + $0x20] sm:%s515] %v540
                  %v542 = vld [vmem:[%s522 + $0x48] sm:%s515]
                  %543 = vst [vmem:[%s523 + $0x24] sm:%s515] %v542
                  %v544 = vld [vmem:[%s522 + $0x50] sm:%s515]
                  %545 = vst [vmem:[%s523 + $0x28] sm:%s515] %v544
                  %v546 = vld [vmem:[%s522 + $0x58] sm:%s515]
                  %547 = vst [vmem:[%s523 + $0x2c] sm:%s515] %v546
                  %v548 = vld [vmem:[%s522 + $0x60] sm:%s515]
                  %549 = vst [vmem:[%s523 + $0x30] sm:%s515] %v548
                  %v550 = vld [vmem:[%s522 + $0x68] sm:%s515]
                  %551 = vst [vmem:[%s523 + $0x34] sm:%s515] %v550
                  %v552 = vld [vmem:[%s522 + $0x70] sm:%s515]
                  %553 = vst [vmem:[%s523 + $0x38] sm:%s515] %v552
                  %v554 = vld [vmem:[%s522 + $0x78] sm:%s515]
                  %555 = vst [vmem:[%s523 + $0x3c] sm:%s515] %v554
                $region103: #{tpu_custom_call.1} parent=90 // loop_footer
                  %s521 = sadd.s32 1, %s517
                $region104: #{tpu_custom_call.1} parent=90 // loop_footer_branch
                  %516 = sbr.rel target = $region100
                $region105: #{tpu_custom_call.1} parent=90 // loop_exit
                  _
              $region91: #{tpu_custom_call.1} parent=75 // pred_fallthru
                _
            $region76: #{tpu_custom_call.1} parent=71 // pred_fallthru
              _
            // Predicated region
            $region77: #{tpu_custom_call.1} parent=71 // pred_check
              _
            $region78: #{tpu_custom_call.1} parent=71 // pred_check_branch
              %461 = sbr.rel (0) target = $region80
            $region79: #{tpu_custom_call.1} parent=71 // pred_region
              %s463 = ssub.s32 16, 1
              loop: start=0, step=1, limit=1
              $region81: #{tpu_custom_call.1} parent=79 // loop_pre_header
                _
              $region82: #{tpu_custom_call.1} parent=79 // loop_header
                %s465 = sphi 0, %s469
                %p466 = scmp.ge.s32.totalorder %s465, 1
                %s470 = sphi %s455, %s455
                %s471 = sphi %s453, %s453
              $region83: #{tpu_custom_call.1} parent=79 // loop_header_branch
                %468 = sbr.rel (%p466) target = $region87
              $region84: #{tpu_custom_call.1} parent=79 // loop_body
                %v472 = vld [vmem:[%s470] sm:%s463]
                %473 = vst [vmem:[%s471] sm:%s463] %v472
                %v474 = vld [vmem:[%s470 + $0x8] sm:%s463]
                %475 = vst [vmem:[%s471 + $0x4] sm:%s463] %v474
                %v476 = vld [vmem:[%s470 + $0x10] sm:%s463]
                %477 = vst [vmem:[%s471 + $0x8] sm:%s463] %v476
                %v478 = vld [vmem:[%s470 + $0x18] sm:%s463]
                %479 = vst [vmem:[%s471 + $0xc] sm:%s463] %v478
                %v480 = vld [vmem:[%s470 + $0x20] sm:%s463]
                %481 = vst [vmem:[%s471 + $0x10] sm:%s463] %v480
                %v482 = vld [vmem:[%s470 + $0x28] sm:%s463]
                %483 = vst [vmem:[%s471 + $0x14] sm:%s463] %v482
                %v484 = vld [vmem:[%s470 + $0x30] sm:%s463]
                %485 = vst [vmem:[%s471 + $0x18] sm:%s463] %v484
                %v486 = vld [vmem:[%s470 + $0x38] sm:%s463]
                %487 = vst [vmem:[%s471 + $0x1c] sm:%s463] %v486
                %v488 = vld [vmem:[%s470 + $0x40] sm:%s463]
                %489 = vst [vmem:[%s471 + $0x20] sm:%s463] %v488
                %v490 = vld [vmem:[%s470 + $0x48] sm:%s463]
                %491 = vst [vmem:[%s471 + $0x24] sm:%s463] %v490
                %v492 = vld [vmem:[%s470 + $0x50] sm:%s463]
                %493 = vst [vmem:[%s471 + $0x28] sm:%s463] %v492
                %v494 = vld [vmem:[%s470 + $0x58] sm:%s463]
                %495 = vst [vmem:[%s471 + $0x2c] sm:%s463] %v494
                %v496 = vld [vmem:[%s470 + $0x60] sm:%s463]
                %497 = vst [vmem:[%s471 + $0x30] sm:%s463] %v496
                %v498 = vld [vmem:[%s470 + $0x68] sm:%s463]
                %499 = vst [vmem:[%s471 + $0x34] sm:%s463] %v498
                %v500 = vld [vmem:[%s470 + $0x70] sm:%s463]
                %501 = vst [vmem:[%s471 + $0x38] sm:%s463] %v500
                %v502 = vld [vmem:[%s470 + $0x78] sm:%s463]
                %503 = vst [vmem:[%s471 + $0x3c] sm:%s463] %v502
              $region85: #{tpu_custom_call.1} parent=79 // loop_footer
                %s469 = sadd.s32 1, %s465
              $region86: #{tpu_custom_call.1} parent=79 // loop_footer_branch
                %464 = sbr.rel target = $region82
              $region87: #{tpu_custom_call.1} parent=79 // loop_exit
                _
            $region80: #{tpu_custom_call.1} parent=71 // pred_fallthru
              _
          $region72: #{tpu_custom_call.1} parent=67 // pred_fallthru
            _
          %556 = vnop
        $region68: #{tpu_custom_call.1} parent=55 // pred_fallthru
          _
      $region56: #{tpu_custom_call.1} parent=5 // pred_fallthru
        _
      %p557 = scmp.le.s32.totalorder 1, %s26
      %p558 = scmp.lt.s32.totalorder %s26, 3
      %p559 = pnand %p557, %p558
      %p560 = pneg %p559
      // Predicated region
      $region106: #{tpu_custom_call.1} parent=5 // pred_check
        _
      $region107: #{tpu_custom_call.1} parent=5 // pred_check_branch
        %562 = sbr.rel (%p559) target = $region109
      $region108: #{tpu_custom_call.1} parent=5 // pred_region
        %s563 = ssub.s32 %s26, 1
        %s564 = sand.u32 %s91, 1
        %s565 = sand.u32 %s91, 1
        %s566 = smul.addr %s565, 64
        %s567 = scalar_lea.vmem [#allocation5], %s566
        // Predicated region
        $region110: #{tpu_custom_call.1} parent=108 // pred_check
          %p568 = pneg %p104
        $region111: #{tpu_custom_call.1} parent=108 // pred_check_branch
          %570 = sbr.rel (%p568) target = $region113
        $region112: #{tpu_custom_call.1} parent=108 // pred_region
          _
        $region113: #{tpu_custom_call.1} parent=108 // pred_fallthru
          _
        %p571 = scmp.lt.s32.totalorder %s31, 1
        %s572 = scalar_select %p571, %s31, 1
        %s573 = smul.addr %s572, 4
        %s574 = scalar_lea.vmem %s0, %s573
        %p575 = pneg %p52
        %p576 = pneg %p49
        %s577 = smul.u32 16, %s31
        %p578 = scmp.lt.s32.totalorder %s577, 31
        %s579 = scalar_select %p578, %s577, 31
        %s580 = smul.addr %s579, 4
        %s581 = scalar_lea.vmem %s1, %s580
        %p582 = pneg %p78
        %p583 = pneg %p75
        %s584 = sand.u32 %s91, 1
        %s585 = sand.u32 %s91, 1
        %s586 = smul.addr %s585, 64
        %s587 = scalar_lea.vmem [#allocation5], %s586
        %p588 = pneg %p104
        %p589 = pneg %p101
        %p590 = pneg %p125
        %p591 = pneg %p122
        %p592 = pneg %p146
        %p593 = pneg %p143
        %p594 = pneg %p167
        %p595 = pneg %p164
        %p596 = pneg %p188
        %p597 = pneg %p185
        %p598 = pneg %p209
        %p599 = pneg %p206
        %p600 = pneg %p230
        %p601 = pneg %p227
        %p602 = pneg %p251
        %p603 = pneg %p248
        %p604 = pneg %p272
        %p605 = pneg %p269
        %p606 = pneg %p293
        %p607 = pneg %p290
        %p608 = pneg %p314
        %p609 = pneg %p311
        %p610 = pneg %p335
        %p611 = pneg %p332
        %p612 = pneg %p356
        %p613 = pneg %p353
        %p614 = pneg %p382
        %p615 = pneg %p379
        %s616 = sand.u32 %s369, 1
        %s617 = scalar_lea.sflag [#allocation9], %s616
        %s618 = sand.u32 %s369, 1
        %s619 = smul.addr %s618, 16
        %s620 = scalar_lea.vmem [#allocation8], %s619
        %p621 = scmp.lt.s32.totalorder %s31, 1
        %s622 = scalar_select %p621, %s31, 1
        %s623 = smul.addr %s622, 4
        %s624 = scalar_lea.vmem %s0, %s623
        %s625 = smul.u32 16, %s31
        %p626 = scmp.lt.s32.totalorder %s625, 31
        %s627 = scalar_select %p626, %s625, 31
        %s628 = smul.addr %s627, 4
        %s629 = scalar_lea.vmem %s1, %s628
        %s630 = smul.u32 16, %s31
        %p632 = scmp.eq.s32.totalorder %s31, 0
        // Predicated region
        $region114: #{tpu_custom_call.1} parent=108 // pred_check
          %p633 = pneg %p632
        $region115: #{tpu_custom_call.1} parent=108 // pred_check_branch
          %635 = sbr.rel (%p633) target = $region117
        $region116: #{tpu_custom_call.1} parent=108 // pred_region
          %vm636 = vcmask 261120
          %637 = vst.msk [vmem:[#allocation2] sm:$0xff] %vm636, 0.0
          %vm638 = vcmask 7168
          %639 = vst.msk [vmem:[#allocation3] sm:$0xff] %vm638, -inf
          %640 = vst.msk [vmem:[#allocation3 + $0x8] sm:$0xff] %vm638, -inf
          %641 = vst.msk [vmem:[#allocation4] sm:$0xff] %vm638, 0.0
          %642 = vst.msk [vmem:[#allocation4 + $0x8] sm:$0xff] %vm638, 0.0
        $region117: #{tpu_custom_call.1} parent=108 // pred_fallthru
          _
        %v643 = vld [vmem:[#allocation2] sm:$0xff]
        %v644 = vld [vmem:[%s624] sm:$0xf]
        %v645 = vld [vmem:[%s629] sm:$0xf]
        %v646 = vld [vmem:[%s629 + $0x4] sm:$0xf]
        %v647 = vld [vmem:[%s629 + $0x8] sm:$0xf]
        %v648 = vld [vmem:[%s629 + $0xc] sm:$0xf]
        %v649 = vld [vmem:[%s629 + $0x10] sm:$0xf]
        %v650 = vld [vmem:[%s629 + $0x14] sm:$0xf]
        %v651 = vld [vmem:[%s629 + $0x18] sm:$0xf]
        %v652 = vld [vmem:[%s629 + $0x1c] sm:$0xf]
        %v653 = vld [vmem:[%s629 + $0x20] sm:$0xf]
        %v654 = vld [vmem:[%s629 + $0x24] sm:$0xf]
        %v655 = vld [vmem:[%s629 + $0x28] sm:$0xf]
        %v656 = vld [vmem:[%s629 + $0x2c] sm:$0xf]
        %v657 = vld [vmem:[%s629 + $0x30] sm:$0xf]
        %v658 = vld [vmem:[%s629 + $0x34] sm:$0xf]
        %v659 = vld [vmem:[%s629 + $0x38] sm:$0xf]
        %v660 = vld [vmem:[%s629 + $0x3c] sm:$0xf]
        %v677 = vunpack.c.l.b16 %v645
        %v678 = vunpack.c.l.b16 %v646
        %v679 = vunpack.c.l.b16 %v647
        %v680 = vunpack.c.l.b16 %v648
        %v681 = vunpack.c.l.b16 %v649
        %v682 = vunpack.c.l.b16 %v650
        %v683 = vunpack.c.l.b16 %v651
        %v684 = vunpack.c.l.b16 %v652
        %v685 = vunpack.c.l.b16 %v653
        %v686 = vunpack.c.l.b16 %v654
        %v687 = vunpack.c.l.b16 %v655
        %v688 = vunpack.c.l.b16 %v656
        %v689 = vunpack.c.l.b16 %v657
        %v690 = vunpack.c.l.b16 %v658
        %v691 = vunpack.c.l.b16 %v659
        %v692 = vunpack.c.l.b16 %v660
        %v693 = vpack.c.b16 %v678, %v677
        %v694 = vpack.c.b16 %v680, %v679
        %v695 = vpack.c.b16 %v682, %v681
        %v696 = vpack.c.b16 %v684, %v683
        %v697 = vpack.c.b16 %v686, %v685
        %v698 = vpack.c.b16 %v688, %v687
        %v699 = vpack.c.b16 %v690, %v689
        %v700 = vpack.c.b16 %v692, %v691
        %709 = vmatpush.bf16.msra.mxu0 %v700
        %710 = vmatpush.bf16.msra.mxu0 %v699
        %711 = vmatpush.bf16.msra.mxu0 %v698
        %712 = vmatpush.bf16.msra.mxu0 %v697
        %713 = vmatpush.bf16.msra.mxu0 %v696
        %714 = vmatpush.bf16.msra.mxu0 %v695
        %715 = vmatpush.bf16.msra.mxu0 %v694
        %716 = vmatpush.bf16.msra.mxu0 %v693
        %717 = vmatmul.bf16.gmra.mxu0 %v644
        %v718 = vpop.f32.mrf.mxu0
        %v719 = vadd.f32 0.0, %v718
        %v720 = vpop.f32.mrf.mxu0
        %721 = vdwg.mxu0
        %v722 = vadd.f32 %v643, %v719
        %vm723 = vcmask 261120
        %724 = vst.msk [vmem:[#allocation2] sm:$0xff] %vm723, %v722
        %v725 = vld [vmem:[%s12] sm:$0xf]
        %v726 = vld [vmem:[%s12 + $0x4] sm:$0xf]
        %v727 = vld [vmem:[%s567] sm:$0xf]
        %v728 = vld [vmem:[%s567 + $0x4] sm:$0xf]
        %v729 = vld [vmem:[%s567 + $0x8] sm:$0xf]
        %v730 = vld [vmem:[%s567 + $0xc] sm:$0xf]
        %v731 = vld [vmem:[%s567 + $0x10] sm:$0xf]
        %v732 = vld [vmem:[%s567 + $0x14] sm:$0xf]
        %v733 = vld [vmem:[%s567 + $0x18] sm:$0xf]
        %v734 = vld [vmem:[%s567 + $0x1c] sm:$0xf]
        %v735 = vld [vmem:[%s567 + $0x20] sm:$0xf]
        %v736 = vld [vmem:[%s567 + $0x24] sm:$0xf]
        %v737 = vld [vmem:[%s567 + $0x28] sm:$0xf]
        %v738 = vld [vmem:[%s567 + $0x2c] sm:$0xf]
        %v739 = vld [vmem:[%s567 + $0x30] sm:$0xf]
        %v740 = vld [vmem:[%s567 + $0x34] sm:$0xf]
        %v741 = vld [vmem:[%s567 + $0x38] sm:$0xf]
        %v742 = vld [vmem:[%s567 + $0x3c] sm:$0xf]
        %v745 = vunpack.c.l.b16 %v725
        %v746 = vunpack.c.l.b16 %v726
        %v747 = vpack.c.b16 %v746, %v745
        %v765 = vunpack.c.l.b16 %v727
        %v766 = vunpack.c.l.b16 %v728
        %v767 = vunpack.c.l.b16 %v729
        %v768 = vunpack.c.l.b16 %v730
        %v769 = vunpack.c.l.b16 %v731
        %v770 = vunpack.c.l.b16 %v732
        %v771 = vunpack.c.l.b16 %v733
        %v772 = vunpack.c.l.b16 %v734
        %v773 = vunpack.c.l.b16 %v735
        %v774 = vunpack.c.l.b16 %v736
        %v775 = vunpack.c.l.b16 %v737
        %v776 = vunpack.c.l.b16 %v738
        %v777 = vunpack.c.l.b16 %v739
        %v778 = vunpack.c.l.b16 %v740
        %v779 = vunpack.c.l.b16 %v741
        %v780 = vunpack.c.l.b16 %v742
        %v781 = vpack.c.b16 %v766, %v765
        %v782 = vpack.c.b16 %v768, %v767
        %v783 = vpack.c.b16 %v770, %v769
        %v784 = vpack.c.b16 %v772, %v771
        %v785 = vpack.c.b16 %v774, %v773
        %v786 = vpack.c.b16 %v776, %v775
        %v787 = vpack.c.b16 %v778, %v777
        %v788 = vpack.c.b16 %v780, %v779
        %797 = vmatpush.bf16.msra.mxu0 %v788
        %798 = vmatpush.bf16.msra.mxu0 %v787
        %799 = vmatpush.bf16.msra.mxu0 %v786
        %800 = vmatpush.bf16.msra.mxu0 %v785
        %801 = vmatpush.bf16.msra.mxu0 %v784
        %802 = vmatpush.bf16.msra.mxu0 %v783
        %803 = vmatpush.bf16.msra.mxu0 %v782
        %804 = vmatpush.bf16.msra.mxu0 %v781
        %805 = vmatmul.bf16.gmra.mxu0 %v747
        %v806 = vpop.f32.mrf.mxu0
        %v807 = vadd.f32 0.0, %v806
        %v808 = vpop.f32.mrf.mxu0
        %v809 = vadd.f32 0.0, %v808
        %810 = vdwg.mxu0
        %s811 = smul.u32 %s31, 128
        %v812 = vlaneseq
        %v813 = vand.u32 %v812, 127
        %v814 = vstv %s811
        %v815 = vadd.s32 %v814, %v813
        %vm816 = vcmp.lt.s32.totalorder %v815, 250
        %v817 = vsel %vm816, %v807, -1e+30
        %v818 = vsel %vm816, %v809, -1e+30
        %819 = vst [vmem:[%s620] sm:$0xff] %v817
        %820 = vst [vmem:[%s620 + $0x8] sm:$0xff] %v818
        %v821 = vld [vmem:[#allocation3] sm:$0xff]
        %v822 = vld [vmem:[#allocation3 + $0x8] sm:$0xff]
        %823 = vmax.xlane.f32.xlu0 %v817
        %v824 = vpop.xlane.xlu0 %823
        %825 = vmax.xlane.f32.xlu0 %v818
        %v826 = vpop.xlane.xlu0 %825
        %v827 = vmax.f32 %v821, %v824
        %v828 = vmax.f32 %v822, %v826
        %v829 = vld [vmem:[#allocation4] sm:$0xff]
        %v830 = vld [vmem:[#allocation4 + $0x8] sm:$0xff]
        %v831 = vsub.f32 %v821, %v827
        %v832 = vsub.f32 %v822, %v828
        %v833 = vmul.f32 %v831, 1.442695
        %v834 = vpow.pop %v833
        %v835 = vmul.f32 %v832, 1.442695
        %v836 = vpow.pop %v835
        %v837 = vmul.f32 %v829, %v834
        %v838 = vmul.f32 %v830, %v836
        %840 = vset.pattern.permute.xlu0 0
        %841 = vperm.xlu0 %840, %v827
        %v842 = vpop.permute.xlu0 %841
        %845 = vset.pattern.permute.xlu0 0
        %846 = vperm.xlu0 %845, %v828
        %v847 = vpop.permute.xlu0 %846
        %v849 = vsub.f32 %v817, %v842
        %v850 = vsub.f32 %v818, %v847
        %v851 = vmul.f32 %v849, 1.442695
        %v852 = vpow.pop %v851
        %v853 = vmul.f32 %v850, 1.442695
        %v854 = vpow.pop %v853
        %855 = vadd.xlane.f32.xlu0 %v852
        %v856 = vpop.xlane.xlu0 %855
        %857 = vadd.xlane.f32.xlu0 %v854
        %v858 = vpop.xlane.xlu0 %857
        %v859 = vadd.f32 %v837, %v856
        %v860 = vadd.f32 %v838, %v858
        %vm861 = vcmask 7168
        %862 = vst.msk [vmem:[#allocation4] sm:$0xff] %vm861, %v859
        %863 = vst.msk [vmem:[#allocation4 + $0x8] sm:$0xff] %vm861, %v860
        %864 = vst.msk [vmem:[#allocation3] sm:$0xff] %vm861, %v827
        %865 = vst.msk [vmem:[#allocation3 + $0x8] sm:$0xff] %vm861, %v828
        %p866 = scmp.eq.s32.totalorder %s31, 1
        // Predicated region
        $region118: #{tpu_custom_call.1} parent=108 // pred_check
          %p867 = pneg %p866
        $region119: #{tpu_custom_call.1} parent=108 // pred_check_branch
          %869 = sbr.rel (%p867) target = $region121
        $region120: #{tpu_custom_call.1} parent=108 // pred_region
          %v870 = vld [vmem:[#allocation2] sm:$0xff]
          %v871 = vld [vmem:[%s3] sm:$0x1]
          %v873 = vperm.slane %v871, 0
          %v875 = vadd.f32 %v870, %v873
          %v876 = vsel %vm723, %v875, 0.0
          %v877 = vrot.slane %v876, 4
          %v878 = vadd.f32 %v876, %v877
          %v879 = vrot.slane %v878, 2
          %v880 = vadd.f32 %v878, %v879
          %v881 = vrot.slane %v880, 1
          %v882 = vadd.f32 %v880, %v881
          %v883 = vrcp.pop 8.0
          %v884 = vmul.f32 8.0, %v883
          %v885 = vsub.f32 1.0, %v884
          %v886 = vmul.f32 %v883, %v885
          %v887 = vadd.f32 %v883, %v886
          %vm888 = vweird.f32 %v883
          %v889 = vsel %vm888, %v883, %v887
          %v890 = vmul.f32 %v882, %v889
          %v891 = vsub.f32 %v875, %v890
          %v892 = vmul.f32 %v891, %v891
          %v893 = vsel %vm723, %v892, 0.0
          %v894 = vrot.slane %v893, 4
          %v895 = vadd.f32 %v893, %v894
          %v896 = vrot.slane %v895, 2
          %v897 = vadd.f32 %v895, %v896
          %v898 = vrot.slane %v897, 1
          %v899 = vadd.f32 %v897, %v898
          %v900 = vmul.f32 %v899, %v889
          %v901 = vadd.f32 %v900, 1e-05
          %v902 = vrsqrt.pop %v901
          %v903 = vmul.f32 %v902, %v901
          %v904 = vmul.f32 %v903, %v902
          %v905 = vmul.f32 0.5, %v904
          %v906 = vsub.f32 1.5, %v905
          %v907 = vmul.f32 %v902, %v906
          %vm908 = vweird.f32 %v901
          %vm909 = vweird.f32 %v902
          %vm910 = vmor %vm908, %vm909
          %v911 = vsel %vm910, %v902, %v907
          %v912 = vmul.f32 %v891, %v911
          %v913 = vld [vmem:[%s4] sm:$0x1]
          %v915 = vperm.slane %v913, 0
          %v917 = vmul.f32 %v912, %v915
          %v918 = vld [vmem:[%s5] sm:$0x1]
          %v920 = vperm.slane %v918, 0
          %v922 = vadd.f32 %v917, %v920
          %v923 = vmax.f32 %v922, 0.0
          %v924 = vpack.c.bf16 %v923, %v923
          %v925 = vld [vmem:[%s6] sm:$0xf]
          %v926 = vld [vmem:[%s6 + $0x4] sm:$0xf]
          %v927 = vld [vmem:[%s6 + $0x8] sm:$0xf]
          %v928 = vld [vmem:[%s6 + $0xc] sm:$0xf]
          %v929 = vld [vmem:[%s7] sm:$0x1]
          %v931 = vperm.slane %v929, 0
          %v937 = vunpack.c.l.b16 %v925
          %v938 = vunpack.c.l.b16 %v926
          %v939 = vunpack.c.l.b16 %v927
          %v940 = vunpack.c.l.b16 %v928
          %v941 = vpack.c.b16 %v938, %v937
          %v942 = vpack.c.b16 %v940, %v939
          %v946 = vsel %vm723, %v924, 0
          %948 = vmatpush.bf16.msra.mxu0 0
          %949 = vmatpush.bf16.msra.mxu0 0
          %950 = vmatpush.bf16.msra.mxu0 0
          %951 = vmatpush.bf16.msra.mxu0 0
          %952 = vmatpush.bf16.msra.mxu0 0
          %953 = vmatpush.bf16.msra.mxu0 0
          %954 = vmatpush.bf16.msra.mxu0 %v942
          %955 = vmatpush.bf16.msra.mxu0 %v941
          %956 = vmatmul.bf16.gmra.mxu0 %v946
          %v957 = vpop.f32.mrf.mxu0
          %v958 = vadd.f32 %v931, %v957
          %v959 = vpop.f32.mrf.mxu0
          %960 = vdwg.mxu0
          %v961 = vsel %vm723, %v958, 0.0
          %v962 = vrot.slane %v961, 4
          %v963 = vadd.f32 %v961, %v962
          %v964 = vrot.slane %v963, 2
          %v965 = vadd.f32 %v963, %v964
          %v966 = vrot.slane %v965, 1
          %v967 = vadd.f32 %v965, %v966
          %v968 = vmul.f32 %v967, %v889
          %v969 = vsub.f32 %v958, %v968
          %v970 = vmul.f32 %v969, %v969
          %v971 = vsel %vm723, %v970, 0.0
          %v972 = vrot.slane %v971, 4
          %v973 = vadd.f32 %v971, %v972
          %v974 = vrot.slane %v973, 2
          %v975 = vadd.f32 %v973, %v974
          %v976 = vrot.slane %v975, 1
          %v977 = vadd.f32 %v975, %v976
          %v978 = vmul.f32 %v977, %v889
          %v979 = vadd.f32 %v978, 1e-05
          %v980 = vrsqrt.pop %v979
          %v981 = vmul.f32 %v980, %v979
          %v982 = vmul.f32 %v981, %v980
          %v983 = vmul.f32 0.5, %v982
          %v984 = vsub.f32 1.5, %v983
          %v985 = vmul.f32 %v980, %v984
          %vm986 = vweird.f32 %v979
          %vm987 = vweird.f32 %v980
          %vm988 = vmor %vm986, %vm987
          %v989 = vsel %vm988, %v980, %v985
          %v990 = vmul.f32 %v969, %v989
          %v991 = vld [vmem:[%s8] sm:$0x1]
          %v993 = vperm.slane %v991, 0
          %v995 = vmul.f32 %v990, %v993
          %v996 = vld [vmem:[%s9] sm:$0x1]
          %v998 = vperm.slane %v996, 0
          %v1000 = vadd.f32 %v995, %v998
          %v1001 = vmax.f32 %v1000, 0.0
          %v1002 = vpack.c.bf16 %v1001, %v1001
          %v1003 = vld [vmem:[%s10] sm:$0xf]
          %v1004 = vld [vmem:[%s10 + $0x4] sm:$0xf]
          %v1005 = vld [vmem:[%s10 + $0x8] sm:$0xf]
          %v1006 = vld [vmem:[%s10 + $0xc] sm:$0xf]
          %v1007 = vld [vmem:[%s11] sm:$0x1]
          %v1009 = vperm.slane %v1007, 0
          %v1015 = vunpack.c.l.b16 %v1003
          %v1016 = vunpack.c.l.b16 %v1004
          %v1017 = vunpack.c.l.b16 %v1005
          %v1018 = vunpack.c.l.b16 %v1006
          %v1019 = vpack.c.b16 %v1016, %v1015
          %v1020 = vpack.c.b16 %v1018, %v1017
          %v1024 = vsel %vm723, %v1002, 0
          %1026 = vmatpush.bf16.msra.mxu0 0
          %1027 = vmatpush.bf16.msra.mxu0 0
          %1028 = vmatpush.bf16.msra.mxu0 0
          %1029 = vmatpush.bf16.msra.mxu0 0
          %1030 = vmatpush.bf16.msra.mxu0 0
          %1031 = vmatpush.bf16.msra.mxu0 0
          %1032 = vmatpush.bf16.msra.mxu0 %v1020
          %1033 = vmatpush.bf16.msra.mxu0 %v1019
          %1034 = vmatmul.bf16.gmra.mxu0 %v1024
          %v1035 = vpop.f32.mrf.mxu0
          %v1036 = vadd.f32 %v1009, %v1035
          %v1037 = vpop.f32.mrf.mxu0
          %1038 = vdwg.mxu0
          %vm1039 = vcmask 130048
          %v1040 = vsel %vm1039, %v1036, -inf
          %1041 = vmax.xlane.f32.xlu0 %v1040
          %v1042 = vpop.xlane.xlu0 %1041
          %v1043 = vsub.f32 %v1036, %v1042
          %v1044 = vmul.f32 %v1043, 1.442695
          %v1045 = vpow.pop %v1044
          %v1046 = vsel %vm1039, %v1045, 0.0
          %1047 = vadd.xlane.f32.xlu0 %v1046
          %v1048 = vpop.xlane.xlu0 %1047
          %v1049 = vrcp.pop %v1048
          %v1050 = vmul.f32 %v1048, %v1049
          %v1051 = vsub.f32 1.0, %v1050
          %v1052 = vmul.f32 %v1049, %v1051
          %v1053 = vadd.f32 %v1049, %v1052
          %vm1054 = vweird.f32 %v1048
          %vm1055 = vweird.f32 %v1049
          %vm1056 = vmor %vm1054, %vm1055
          %v1057 = vsel %vm1056, %v1049, %v1053
          %v1058 = vand.u32 2147483647, %v1048
          %vm1059 = vcmp.eq.f32.partialorder %v1058, 8.507059e+37
          %v1060 = vand.u32 %v1048, 2147483648
          %v1061 = vor.u32 1.1754944e-38, %v1060
          %v1062 = vsel %vm1059, %v1061, %v1057
          %v1063 = vmul.f32 %v1045, %v1062
          %1064 = vst.msk [vmem:[#allocation6] sm:$0xff] %vm1039, %v1063
          %v1065 = vld [vmem:[#allocation3] sm:$0xff]
          %v1066 = vld [vmem:[#allocation3 + $0x8] sm:$0xff]
          %v1067 = vld [vmem:[#allocation4] sm:$0xff]
          %v1068 = vld [vmem:[#allocation4 + $0x8] sm:$0xff]
          %v1069 = vlog2.pop %v1067
          %v1070 = vmul.f32 %v1069, 0.6931472
          %v1071 = vlog2.pop %v1068
          %v1072 = vmul.f32 %v1071, 0.6931472
          %v1073 = vadd.f32 %v1065, %v1070
          %v1074 = vadd.f32 %v1066, %v1072
          %1075 = vst.msk [vmem:[%s14] sm:$0xff] %vm861, %v1073
          %1076 = vst.msk [vmem:[%s14 + $0x8] sm:$0xff] %vm861, %v1074
        $region121: #{tpu_custom_call.1} parent=108 // pred_fallthru
          _
        %s1077 = sand.u32 %s369, 1
        %s1078 = scalar_lea.sflag [#allocation9], %s1077
        %s1079 = sand.u32 %s369, 1
        %s1080 = smul.addr %s1079, 16
        %s1081 = scalar_lea.vmem [#allocation8], %s1080
        // Predicated region
        $region122: #{tpu_custom_call.1} parent=108 // pred_check
          %p1082 = pneg %p332
        $region123: #{tpu_custom_call.1} parent=108 // pred_check_branch
          %1084 = sbr.rel (%p1082) target = $region125
        $region124: #{tpu_custom_call.1} parent=108 // pred_region
          %1086 = vsyncadd [#allocation7], 0
          %s1088 = sshll.u32 [#allocation6], 4
          %s1089 = int_to_ptr.vmem [resolvable:$true] %s1088
          %s1090 = sshll.u32 %s13, 4
          %s1091 = int_to_ptr.hbm [resolvable:$true] %s1090
          %1093 = dma.vmem_to_hbm [thread:$0]  %s1089, 128, %s1091, [#allocation7]
        $region125: #{tpu_custom_call.1} parent=108 // pred_fallthru
          _
        // Predicated region
        $region126: #{tpu_custom_call.1} parent=108 // pred_check
          %p1094 = pneg %p353
        $region127: #{tpu_custom_call.1} parent=108 // pred_check_branch
          %1096 = sbr.rel (%p1094) target = $region129
        $region128: #{tpu_custom_call.1} parent=108 // pred_region
          _
        $region129: #{tpu_custom_call.1} parent=108 // pred_fallthru
          _
        // Predicated region
        $region130: #{tpu_custom_call.1} parent=108 // pred_check
          %p1097 = pneg %p379
        $region131: #{tpu_custom_call.1} parent=108 // pred_check_branch
          %1099 = sbr.rel (%p1097) target = $region133
        $region132: #{tpu_custom_call.1} parent=108 // pred_region
          %1101 = vsyncadd %s1078, 0
          %s1102 = smul.addr %s31, 8
          %s1103 = scalar_lea.hbm %s15, %s1102
          %s1104 = sshll.u32 %s1081, 4
          %s1105 = int_to_ptr.vmem [resolvable:$true] %s1104
          %s1106 = sshll.u32 %s1103, 4
          %s1107 = int_to_ptr.hbm [resolvable:$true] %s1106
          %1112 = dma.vmem_to_hbm [thread:$0]  %s1105, 256, %s1107, %s1078, 128, 256, 8
        $region133: #{tpu_custom_call.1} parent=108 // pred_fallthru
          _
        // Predicated region
        $region134: #{tpu_custom_call.1} parent=108 // pred_check
          %p1113 = pneg %p332
        $region135: #{tpu_custom_call.1} parent=108 // pred_check_branch
          %1115 = sbr.rel (%p1113) target = $region137
        $region136: #{tpu_custom_call.1} parent=108 // pred_region
          %1117 = dma.done [#allocation7], 128
        $region137: #{tpu_custom_call.1} parent=108 // pred_fallthru
          _
        // Predicated region
        $region138: #{tpu_custom_call.1} parent=108 // pred_check
          %p1118 = pneg %p353
        $region139: #{tpu_custom_call.1} parent=108 // pred_check_branch
          %1120 = sbr.rel (%p1118) target = $region141
        $region140: #{tpu_custom_call.1} parent=108 // pred_region
          _
        $region141: #{tpu_custom_call.1} parent=108 // pred_fallthru
          _
      $region109: #{tpu_custom_call.1} parent=5 // pred_fallthru
        _
      %p1121 = scmp.le.s32.totalorder 2, %s26
      // Predicated region
      $region142: #{tpu_custom_call.1} parent=5 // pred_check
        %p1122 = pneg %p1121
      $region143: #{tpu_custom_call.1} parent=5 // pred_check_branch
        %1124 = sbr.rel (%p1122) target = $region145
      $region144: #{tpu_custom_call.1} parent=5 // pred_region
        %s1125 = ssub.s32 %s26, 2
        // Predicated region
        $region146: #{tpu_custom_call.1} parent=144 // pred_check
          %p1126 = pneg %p385
        $region147: #{tpu_custom_call.1} parent=144 // pred_check_branch
          %1128 = sbr.rel (%p1126) target = $region149
        $region148: #{tpu_custom_call.1} parent=144 // pred_region
          %s1129 = sand.u32 %s370, 1
          %s1130 = scalar_lea.sflag [#allocation9], %s1129
          %s1131 = sand.u32 %s370, 1
          %s1132 = smul.addr %s1131, 16
          %s1133 = scalar_lea.vmem [#allocation8], %s1132
          %1135 = dma.done %s1130, 256
        $region149: #{tpu_custom_call.1} parent=144 // pred_fallthru
          _
      $region145: #{tpu_custom_call.1} parent=5 // pred_fallthru
        _
    $region6: #{tpu_custom_call.1} parent=1 // loop_footer
      %s30 = sadd.s32 1, %s26
    $region7: #{tpu_custom_call.1} parent=1 // loop_footer_branch
      %25 = sbr.rel target = $region3
    $region8: #{tpu_custom_call.1} parent=1 // loop_exit
      _
    %1136 = vsyncpa [#allocation7], 1
    %s1137 = scalar_lea.sflag [#allocation7], 1
    %1138 = vsyncpa %s1137, 1
    %1139 = vsyncpa [#allocation9], 1
    %s1140 = scalar_lea.sflag [#allocation9], 1
    %1141 = vsyncpa %s1140, 1

</llo_original>
